<compile_context>
chip_gen: v5e
topology: v5e:2x2
jax: 0.10.0
libtpu: 0.0.40
codegen_flags: <defaults>
</compile_context>

<pallas_src>
import functools

import jax
import jax.numpy as jnp
from jax import lax
from jax.experimental import pallas as pl
from jax.experimental.pallas import tpu as pltpu


def _decoder_kernel(
    tgt_ref, mem_ref,
    # self-attention (fused QKV) + output projection
    wqkv_s_ref, bqkv_s_ref, wo_s_ref, bo_s_ref,
    # cross-attention: Q from x, fused KV from memory, output projection
    wq_c_ref, bq_c_ref, wkv_c_ref, bkv_c_ref, wo_c_ref, bo_c_ref,
    # feed-forward
    w1_ref, b1_ref, w2_ref, b2_ref,
    # layer norms
    ln1_g_ref, ln1_b_ref, ln2_g_ref, ln2_b_ref, ln3_g_ref, ln3_b_ref,
    out_ref,
    *, num_layers, num_heads, eps):
    x = tgt_ref[...].astype(jnp.float32)     # [Lt, D]
    mem = mem_ref[...].astype(jnp.float32)   # [Lm, D]
    D = x.shape[-1]
    Dh = D // num_heads
    scale = 1.0 / float(Dh) ** 0.5

    # Load the shared weights once (VMEM resident for the whole layer loop).
    wqkv_s = wqkv_s_ref[...]; bqkv_s = bqkv_s_ref[...]
    wo_s = wo_s_ref[...];     bo_s = bo_s_ref[...]
    wq_c = wq_c_ref[...];     bq_c = bq_c_ref[...]
    wkv_c = wkv_c_ref[...];   bkv_c = bkv_c_ref[...]
    wo_c = wo_c_ref[...];     bo_c = bo_c_ref[...]
    w1 = w1_ref[...];         b1 = b1_ref[...]
    w2 = w2_ref[...];         b2 = b2_ref[...]
    g1 = ln1_g_ref[...];      be1 = ln1_b_ref[...]
    g2 = ln2_g_ref[...];      be2 = ln2_b_ref[...]
    g3 = ln3_g_ref[...];      be3 = ln3_b_ref[...]

    # Cross-attention K/V only depend on (memory, shared weights): hoist out
    # of the layer loop — identical for every layer.
    kv_c = jnp.dot(mem, wkv_c, preferred_element_type=jnp.float32) + bkv_c
    k_c = kv_c[:, :D]
    v_c = kv_c[:, D:]

    def mha(q, k, v, wo, bo):
        # q: [Lq, D], k/v: [Lk, D]; static per-head lane slices (H is small).
        head_outs = []
        for h in range(num_heads):
            lo, hi = h * Dh, (h + 1) * Dh
            qh = q[:, lo:hi] * scale           # scale q, not the LqxLk scores
            kh = k[:, lo:hi]
            vh = v[:, lo:hi]
            # QK^T without materializing a transpose: contract last dims.
            s = lax.dot_general(qh, kh, (((1,), (1,)), ((), ())),
                                preferred_element_type=jnp.float32)
            s = s - jnp.max(s, axis=-1, keepdims=True)
            p = jnp.exp(s)
            denom = jnp.sum(p, axis=-1, keepdims=True)
            p = p * pl.reciprocal(denom, approx=True)
            head_outs.append(jnp.dot(p, vh, preferred_element_type=jnp.float32))
        o = jnp.concatenate(head_outs, axis=-1)          # [Lq, D]
        return jnp.dot(o, wo, preferred_element_type=jnp.float32) + bo

    def add_ln(xv, r, g, b):
        y = xv + r
        mu = jnp.mean(y, axis=-1, keepdims=True)
        var = jnp.mean(jnp.square(y - mu), axis=-1, keepdims=True)
        return (y - mu) * lax.rsqrt(var + eps) * g + b

    def layer_fn(_, xv):
        # --- self-attention block (fused QKV projection) ---
        qkv = jnp.dot(xv, wqkv_s, preferred_element_type=jnp.float32) + bqkv_s
        sa = mha(qkv[:, :D], qkv[:, D:2 * D], qkv[:, 2 * D:], wo_s, bo_s)
        xv = add_ln(xv, sa, g1, be1)
        # --- cross-attention block (K/V precomputed above) ---
        q_c = jnp.dot(xv, wq_c, preferred_element_type=jnp.float32) + bq_c
        ca = mha(q_c, k_c, v_c, wo_c, bo_c)
        xv = add_ln(xv, ca, g2, be2)
        # --- feed-forward block ---
        hid = jnp.dot(xv, w1, preferred_element_type=jnp.float32) + b1
        hid = jnp.maximum(hid, 0.0)
        f = jnp.dot(hid, w2, preferred_element_type=jnp.float32) + b2
        xv = add_ln(xv, f, g3, be3)
        return xv
        # TODO(synk): dropout layers are identity here (deterministic eval mode).

    x = lax.fori_loop(0, num_layers, layer_fn, x)
    out_ref[...] = x.astype(out_ref.dtype)


_PARAM_ORDER = (
    "self_wqkv", "self_bqkv", "self_wo", "self_bo",
    "cross_wq", "cross_bq", "cross_wkv", "cross_bkv", "cross_wo", "cross_bo",
    "ffn_w1", "ffn_b1", "ffn_w2", "ffn_b2",
    "ln1_g", "ln1_b", "ln2_g", "ln2_b", "ln3_g", "ln3_b",
)


def decoder_forward(target, memory, params, num_layers, num_heads):
    B, Lt, D = target.shape
    Lm = memory.shape[1]
    assert D % num_heads == 0

    args = [params[name] for name in _PARAM_ORDER]
    in_specs = [
        pl.BlockSpec((None, Lt, D), lambda b: (b, 0, 0)),   # target slice
        pl.BlockSpec((None, Lm, D), lambda b: (b, 0, 0)),   # memory slice
    ] + [pl.BlockSpec(p.shape, lambda b: (0, 0)) for p in args]  # weights

    return pl.pallas_call(
        functools.partial(_decoder_kernel,
                          num_layers=num_layers,
                          num_heads=num_heads,
                          eps=1e-5),
        out_shape=jax.ShapeDtypeStruct((B, Lt, D), target.dtype),
        grid=(B,),
        in_specs=in_specs,
        out_specs=pl.BlockSpec((None, Lt, D), lambda b: (b, 0, 0)),
        compiler_params=pltpu.CompilerParams(
            dimension_semantics=("parallel",)),
    )(target, memory, *args)


def init_params(key, D, Dff):
    ks = jax.random.split(key, 8)

    def w(k, shape, fan_in):
        return jax.random.normal(k, shape, jnp.float32) / jnp.sqrt(fan_in)

    p = {
        # self-attention: fused [D, 3D] QKV weight + bias, output projection
        "self_wqkv": w(ks[0], (D, 3 * D), D),
        "self_bqkv": jnp.zeros((1, 3 * D), jnp.float32),
        "self_wo": w(ks[1], (D, D), D),
        "self_bo": jnp.zeros((1, D), jnp.float32),
        # cross-attention: Q weight, fused [D, 2D] KV weight, output projection
        "cross_wq": w(ks[2], (D, D), D),
        "cross_bq": jnp.zeros((1, D), jnp.float32),
        "cross_wkv": w(ks[3], (D, 2 * D), D),
        "cross_bkv": jnp.zeros((1, 2 * D), jnp.float32),
        "cross_wo": w(ks[4], (D, D), D),
        "cross_bo": jnp.zeros((1, D), jnp.float32),
        # feed-forward
        "ffn_w1": w(ks[5], (D, Dff), D),
        "ffn_b1": jnp.zeros((1, Dff), jnp.float32),
        "ffn_w2": w(ks[6], (Dff, D), Dff),
        "ffn_b2": jnp.zeros((1, D), jnp.float32),
    }
    for ln in ("ln1", "ln2", "ln3"):
        p[f"{ln}_g"] = jnp.ones((1, D), jnp.float32)
        p[f"{ln}_b"] = jnp.zeros((1, D), jnp.float32)
    return p


if __name__ == "__main__":
    B, Lt, Lm, D, H, Dff = 2, 8, 16, 32, 4, 64
    num_layers = 2

    key = jax.random.PRNGKey(0)
    k_t, k_m, k_p = jax.random.split(key, 3)
    target = jax.random.normal(k_t, (B, Lt, D), jnp.float32)
    memory = jax.random.normal(k_m, (B, Lm, D), jnp.float32)
    params = init_params(k_p, D, Dff)

    out = decoder_forward(target, memory, params, num_layers, H)
    out = jax.block_until_ready(out)
    assert out.shape == (B, Lt, D) and bool(jnp.all(jnp.isfinite(out)))
    print("KERNEL_OK")
</pallas_src>

<mosaic_0001>
module attributes {stable_mosaic.version = 11 : i64} {
  func.func @_decoder_kernel(%arg0: i32, %arg1: memref<1x8x32xf32, #tpu.memory_space<vmem>>, %arg2: memref<1x16x32xf32, #tpu.memory_space<vmem>>, %arg3: memref<32x96xf32, #tpu.memory_space<vmem>>, %arg4: memref<1x96xf32, #tpu.memory_space<vmem>>, %arg5: memref<32x32xf32, #tpu.memory_space<vmem>>, %arg6: memref<1x32xf32, #tpu.memory_space<vmem>>, %arg7: memref<32x32xf32, #tpu.memory_space<vmem>>, %arg8: memref<1x32xf32, #tpu.memory_space<vmem>>, %arg9: memref<32x64xf32, #tpu.memory_space<vmem>>, %arg10: memref<1x64xf32, #tpu.memory_space<vmem>>, %arg11: memref<32x32xf32, #tpu.memory_space<vmem>>, %arg12: memref<1x32xf32, #tpu.memory_space<vmem>>, %arg13: memref<32x64xf32, #tpu.memory_space<vmem>>, %arg14: memref<1x64xf32, #tpu.memory_space<vmem>>, %arg15: memref<64x32xf32, #tpu.memory_space<vmem>>, %arg16: memref<1x32xf32, #tpu.memory_space<vmem>>, %arg17: memref<1x32xf32, #tpu.memory_space<vmem>>, %arg18: memref<1x32xf32, #tpu.memory_space<vmem>>, %arg19: memref<1x32xf32, #tpu.memory_space<vmem>>, %arg20: memref<1x32xf32, #tpu.memory_space<vmem>>, %arg21: memref<1x32xf32, #tpu.memory_space<vmem>>, %arg22: memref<1x32xf32, #tpu.memory_space<vmem>>, %arg23: memref<1x8x32xf32, #tpu.memory_space<vmem>>) attributes {dimension_semantics = [#tpu.dimension_semantics<parallel>], iteration_bounds = array<i64: 2>, scalar_prefetch = 0 : i64, scratch_operands = 0 : i64, tpu.core_type = #tpu.core_type<tc>, window_params = [{transform_indices = @transform_0, window_bounds = array<i64: 1, 8, 32>}, {transform_indices = @transform_1, window_bounds = array<i64: 1, 16, 32>}, {pipeline_mode = #tpu.pipeline_mode<synchronous>, transform_indices = @transform_2, window_bounds = array<i64: 32, 96>}, {pipeline_mode = #tpu.pipeline_mode<synchronous>, transform_indices = @transform_3, window_bounds = array<i64: 1, 96>}, {pipeline_mode = #tpu.pipeline_mode<synchronous>, transform_indices = @transform_4, window_bounds = array<i64: 32, 32>}, {pipeline_mode = #tpu.pipeline_mode<synchronous>, transform_indices = @transform_5, window_bounds = array<i64: 1, 32>}, {pipeline_mode = #tpu.pipeline_mode<synchronous>, transform_indices = @transform_6, window_bounds = array<i64: 32, 32>}, {pipeline_mode = #tpu.pipeline_mode<synchronous>, transform_indices = @transform_7, window_bounds = array<i64: 1, 32>}, {pipeline_mode = #tpu.pipeline_mode<synchronous>, transform_indices = @transform_8, window_bounds = array<i64: 32, 64>}, {pipeline_mode = #tpu.pipeline_mode<synchronous>, transform_indices = @transform_9, window_bounds = array<i64: 1, 64>}, {pipeline_mode = #tpu.pipeline_mode<synchronous>, transform_indices = @transform_10, window_bounds = array<i64: 32, 32>}, {pipeline_mode = #tpu.pipeline_mode<synchronous>, transform_indices = @transform_11, window_bounds = array<i64: 1, 32>}, {pipeline_mode = #tpu.pipeline_mode<synchronous>, transform_indices = @transform_12, window_bounds = array<i64: 32, 64>}, {pipeline_mode = #tpu.pipeline_mode<synchronous>, transform_indices = @transform_13, window_bounds = array<i64: 1, 64>}, {pipeline_mode = #tpu.pipeline_mode<synchronous>, transform_indices = @transform_14, window_bounds = array<i64: 64, 32>}, {pipeline_mode = #tpu.pipeline_mode<synchronous>, transform_indices = @transform_15, window_bounds = array<i64: 1, 32>}, {pipeline_mode = #tpu.pipeline_mode<synchronous>, transform_indices = @transform_16, window_bounds = array<i64: 1, 32>}, {pipeline_mode = #tpu.pipeline_mode<synchronous>, transform_indices = @transform_17, window_bounds = array<i64: 1, 32>}, {pipeline_mode = #tpu.pipeline_mode<synchronous>, transform_indices = @transform_18, window_bounds = array<i64: 1, 32>}, {pipeline_mode = #tpu.pipeline_mode<synchronous>, transform_indices = @transform_19, window_bounds = array<i64: 1, 32>}, {pipeline_mode = #tpu.pipeline_mode<synchronous>, transform_indices = @transform_20, window_bounds = array<i64: 1, 32>}, {pipeline_mode = #tpu.pipeline_mode<synchronous>, transform_indices = @transform_21, window_bounds = array<i64: 1, 32>}, {transform_indices = @transform_22, window_bounds = array<i64: 1, 8, 32>}]} {
    %c0 = arith.constant 0 : index
    %c0_0 = arith.constant 0 : index
    %c0_1 = arith.constant 0 : index
    %0 = vector.load %arg1[%c0, %c0_0, %c0_1] : memref<1x8x32xf32, #tpu.memory_space<vmem>>, vector<1x8x32xf32>
    %1 = vector.shape_cast %0 : vector<1x8x32xf32> to vector<8x32xf32>
    %c0_2 = arith.constant 0 : index
    %c0_3 = arith.constant 0 : index
    %c0_4 = arith.constant 0 : index
    %2 = vector.load %arg2[%c0_2, %c0_3, %c0_4] : memref<1x16x32xf32, #tpu.memory_space<vmem>>, vector<1x16x32xf32>
    %3 = vector.shape_cast %2 : vector<1x16x32xf32> to vector<16x32xf32>
    %c0_5 = arith.constant 0 : index
    %c0_6 = arith.constant 0 : index
    %4 = vector.load %arg3[%c0_5, %c0_6] : memref<32x96xf32, #tpu.memory_space<vmem>>, vector<32x96xf32>
    %c0_7 = arith.constant 0 : index
    %c0_8 = arith.constant 0 : index
    %5 = vector.load %arg4[%c0_7, %c0_8] : memref<1x96xf32, #tpu.memory_space<vmem>>, vector<1x96xf32>
    %c0_9 = arith.constant 0 : index
    %c0_10 = arith.constant 0 : index
    %6 = vector.load %arg5[%c0_9, %c0_10] : memref<32x32xf32, #tpu.memory_space<vmem>>, vector<32x32xf32>
    %c0_11 = arith.constant 0 : index
    %c0_12 = arith.constant 0 : index
    %7 = vector.load %arg6[%c0_11, %c0_12] : memref<1x32xf32, #tpu.memory_space<vmem>>, vector<1x32xf32>
    %c0_13 = arith.constant 0 : index
    %c0_14 = arith.constant 0 : index
    %8 = vector.load %arg7[%c0_13, %c0_14] : memref<32x32xf32, #tpu.memory_space<vmem>>, vector<32x32xf32>
    %c0_15 = arith.constant 0 : index
    %c0_16 = arith.constant 0 : index
    %9 = vector.load %arg8[%c0_15, %c0_16] : memref<1x32xf32, #tpu.memory_space<vmem>>, vector<1x32xf32>
    %c0_17 = arith.constant 0 : index
    %c0_18 = arith.constant 0 : index
    %10 = vector.load %arg9[%c0_17, %c0_18] : memref<32x64xf32, #tpu.memory_space<vmem>>, vector<32x64xf32>
    %c0_19 = arith.constant 0 : index
    %c0_20 = arith.constant 0 : index
    %11 = vector.load %arg10[%c0_19, %c0_20] : memref<1x64xf32, #tpu.memory_space<vmem>>, vector<1x64xf32>
    %c0_21 = arith.constant 0 : index
    %c0_22 = arith.constant 0 : index
    %12 = vector.load %arg11[%c0_21, %c0_22] : memref<32x32xf32, #tpu.memory_space<vmem>>, vector<32x32xf32>
    %c0_23 = arith.constant 0 : index
    %c0_24 = arith.constant 0 : index
    %13 = vector.load %arg12[%c0_23, %c0_24] : memref<1x32xf32, #tpu.memory_space<vmem>>, vector<1x32xf32>
    %c0_25 = arith.constant 0 : index
    %c0_26 = arith.constant 0 : index
    %14 = vector.load %arg13[%c0_25, %c0_26] : memref<32x64xf32, #tpu.memory_space<vmem>>, vector<32x64xf32>
    %c0_27 = arith.constant 0 : index
    %c0_28 = arith.constant 0 : index
    %15 = vector.load %arg14[%c0_27, %c0_28] : memref<1x64xf32, #tpu.memory_space<vmem>>, vector<1x64xf32>
    %c0_29 = arith.constant 0 : index
    %c0_30 = arith.constant 0 : index
    %16 = vector.load %arg15[%c0_29, %c0_30] : memref<64x32xf32, #tpu.memory_space<vmem>>, vector<64x32xf32>
    %c0_31 = arith.constant 0 : index
    %c0_32 = arith.constant 0 : index
    %17 = vector.load %arg16[%c0_31, %c0_32] : memref<1x32xf32, #tpu.memory_space<vmem>>, vector<1x32xf32>
    %c0_33 = arith.constant 0 : index
    %c0_34 = arith.constant 0 : index
    %18 = vector.load %arg17[%c0_33, %c0_34] : memref<1x32xf32, #tpu.memory_space<vmem>>, vector<1x32xf32>
    %c0_35 = arith.constant 0 : index
    %c0_36 = arith.constant 0 : index
    %19 = vector.load %arg18[%c0_35, %c0_36] : memref<1x32xf32, #tpu.memory_space<vmem>>, vector<1x32xf32>
    %c0_37 = arith.constant 0 : index
    %c0_38 = arith.constant 0 : index
    %20 = vector.load %arg19[%c0_37, %c0_38] : memref<1x32xf32, #tpu.memory_space<vmem>>, vector<1x32xf32>
    %c0_39 = arith.constant 0 : index
    %c0_40 = arith.constant 0 : index
    %21 = vector.load %arg20[%c0_39, %c0_40] : memref<1x32xf32, #tpu.memory_space<vmem>>, vector<1x32xf32>
    %c0_41 = arith.constant 0 : index
    %c0_42 = arith.constant 0 : index
    %22 = vector.load %arg21[%c0_41, %c0_42] : memref<1x32xf32, #tpu.memory_space<vmem>>, vector<1x32xf32>
    %c0_43 = arith.constant 0 : index
    %c0_44 = arith.constant 0 : index
    %23 = vector.load %arg22[%c0_43, %c0_44] : memref<1x32xf32, #tpu.memory_space<vmem>>, vector<1x32xf32>
    %cst = arith.constant dense<0.000000e+00> : vector<16x64xf32>
    %24 = tpu.matmul %3, %10, %cst {dimension_numbers = #tpu.dot_dimension_numbers<[1], [0], [0], [1], [0, 0, 1, 1], [], []>} : vector<16x32xf32>, vector<32x64xf32>, vector<16x64xf32> -> vector<16x64xf32>
    %25 = vector.broadcast %11 : vector<1x64xf32> to vector<16x64xf32>
    %26 = arith.addf %24, %25 : vector<16x64xf32>
    %27 = vector.extract_strided_slice %26 {offsets = [0, 0], sizes = [16, 32], strides = [1, 1]} : vector<16x64xf32> to vector<16x32xf32>
    %28 = vector.extract_strided_slice %26 {offsets = [0, 32], sizes = [16, 32], strides = [1, 1]} : vector<16x64xf32> to vector<16x32xf32>
    %c0_i32 = arith.constant 0 : i32
    %c2_i32 = arith.constant 2 : i32
    %29 = arith.addi %c0_i32, %c2_i32 : i32
    %c1_i32 = arith.constant 1 : i32
    %30 = scf.for %arg24 = %c0_i32 to %29 step %c1_i32 iter_args(%arg25 = %1) -> (vector<8x32xf32>)  : i32 {
      %cst_48 = arith.constant dense<0.000000e+00> : vector<8x96xf32>
      %34 = tpu.matmul %arg25, %4, %cst_48 {dimension_numbers = #tpu.dot_dimension_numbers<[1], [0], [0], [1], [0, 0, 1, 1], [], []>} : vector<8x32xf32>, vector<32x96xf32>, vector<8x96xf32> -> vector<8x96xf32>
      %35 = vector.broadcast %5 : vector<1x96xf32> to vector<8x96xf32>
      %36 = arith.addf %34, %35 : vector<8x96xf32>
      %37 = vector.extract_strided_slice %36 {offsets = [0, 0], sizes = [8, 32], strides = [1, 1]} : vector<8x96xf32> to vector<8x32xf32>
      %38 = vector.extract_strided_slice %36 {offsets = [0, 32], sizes = [8, 32], strides = [1, 1]} : vector<8x96xf32> to vector<8x32xf32>
      %39 = vector.extract_strided_slice %36 {offsets = [0, 64], sizes = [8, 32], strides = [1, 1]} : vector<8x96xf32> to vector<8x32xf32>
      %40 = vector.extract_strided_slice %37 {offsets = [0, 0], sizes = [8, 8], strides = [1, 1]} : vector<8x32xf32> to vector<8x8xf32>
      %cst_49 = arith.constant 0.353553385 : f32
      %41 = vector.broadcast %cst_49 : f32 to vector<8x8xf32>
      %42 = arith.mulf %40, %41 : vector<8x8xf32>
      %43 = vector.extract_strided_slice %38 {offsets = [0, 0], sizes = [8, 8], strides = [1, 1]} : vector<8x32xf32> to vector<8x8xf32>
      %44 = vector.extract_strided_slice %39 {offsets = [0, 0], sizes = [8, 8], strides = [1, 1]} : vector<8x32xf32> to vector<8x8xf32>
      %cst_50 = arith.constant dense<0.000000e+00> : vector<8x8xf32>
      %45 = tpu.matmul %42, %43, %cst_50 {dimension_numbers = #tpu.dot_dimension_numbers<[1], [1], [0], [0], [0, 0, 1, 0], [], []>} : vector<8x8xf32>, vector<8x8xf32>, vector<8x8xf32> -> vector<8x8xf32>
      %cst_51 = arith.constant dense<0xFF800000> : vector<8xf32>
      %46 = vector.multi_reduction <maximumf>, %45, %cst_51 [1] : vector<8x8xf32> to vector<8xf32>
      %47 = vector.shape_cast %46 : vector<8xf32> to vector<8x1xf32>
      %48 = vector.broadcast %47 : vector<8x1xf32> to vector<8x8xf32>
      %49 = arith.subf %45, %48 : vector<8x8xf32>
      %50 = math.exp %49 : vector<8x8xf32>
      %cst_52 = arith.constant dense<0.000000e+00> : vector<8xf32>
      %51 = vector.multi_reduction <add>, %50, %cst_52 [1] : vector<8x8xf32> to vector<8xf32>
      %52 = vector.shape_cast %51 : vector<8xf32> to vector<8x1xf32>
      %53 = tpu.reciprocal %52 {approx = true} : vector<8x1xf32> -> vector<8x1xf32>
      %54 = vector.broadcast %53 : vector<8x1xf32> to vector<8x8xf32>
      %55 = arith.mulf %50, %54 : vector<8x8xf32>
      %cst_53 = arith.constant dense<0.000000e+00> : vector<8x8xf32>
      %56 = tpu.matmul %55, %44, %cst_53 {dimension_numbers = #tpu.dot_dimension_numbers<[1], [0], [0], [1], [0, 0, 1, 1], [], []>} : vector<8x8xf32>, vector<8x8xf32>, vector<8x8xf32> -> vector<8x8xf32>
      %57 = vector.extract_strided_slice %37 {offsets = [0, 8], sizes = [8, 8], strides = [1, 1]} : vector<8x32xf32> to vector<8x8xf32>
      %cst_54 = arith.constant 0.353553385 : f32
      %58 = vector.broadcast %cst_54 : f32 to vector<8x8xf32>
      %59 = arith.mulf %57, %58 : vector<8x8xf32>
      %60 = vector.extract_strided_slice %38 {offsets = [0, 8], sizes = [8, 8], strides = [1, 1]} : vector<8x32xf32> to vector<8x8xf32>
      %61 = vector.extract_strided_slice %39 {offsets = [0, 8], sizes = [8, 8], strides = [1, 1]} : vector<8x32xf32> to vector<8x8xf32>
      %cst_55 = arith.constant dense<0.000000e+00> : vector<8x8xf32>
      %62 = tpu.matmul %59, %60, %cst_55 {dimension_numbers = #tpu.dot_dimension_numbers<[1], [1], [0], [0], [0, 0, 1, 0], [], []>} : vector<8x8xf32>, vector<8x8xf32>, vector<8x8xf32> -> vector<8x8xf32>
      %cst_56 = arith.constant dense<0xFF800000> : vector<8xf32>
      %63 = vector.multi_reduction <maximumf>, %62, %cst_56 [1] : vector<8x8xf32> to vector<8xf32>
      %64 = vector.shape_cast %63 : vector<8xf32> to vector<8x1xf32>
      %65 = vector.broadcast %64 : vector<8x1xf32> to vector<8x8xf32>
      %66 = arith.subf %62, %65 : vector<8x8xf32>
      %67 = math.exp %66 : vector<8x8xf32>
      %cst_57 = arith.constant dense<0.000000e+00> : vector<8xf32>
      %68 = vector.multi_reduction <add>, %67, %cst_57 [1] : vector<8x8xf32> to vector<8xf32>
      %69 = vector.shape_cast %68 : vector<8xf32> to vector<8x1xf32>
      %70 = tpu.reciprocal %69 {approx = true} : vector<8x1xf32> -> vector<8x1xf32>
      %71 = vector.broadcast %70 : vector<8x1xf32> to vector<8x8xf32>
      %72 = arith.mulf %67, %71 : vector<8x8xf32>
      %cst_58 = arith.constant dense<0.000000e+00> : vector<8x8xf32>
      %73 = tpu.matmul %72, %61, %cst_58 {dimension_numbers = #tpu.dot_dimension_numbers<[1], [0], [0], [1], [0, 0, 1, 1], [], []>} : vector<8x8xf32>, vector<8x8xf32>, vector<8x8xf32> -> vector<8x8xf32>
      %74 = vector.extract_strided_slice %37 {offsets = [0, 16], sizes = [8, 8], strides = [1, 1]} : vector<8x32xf32> to vector<8x8xf32>
      %cst_59 = arith.constant 0.353553385 : f32
      %75 = vector.broadcast %cst_59 : f32 to vector<8x8xf32>
      %76 = arith.mulf %74, %75 : vector<8x8xf32>
      %77 = vector.extract_strided_slice %38 {offsets = [0, 16], sizes = [8, 8], strides = [1, 1]} : vector<8x32xf32> to vector<8x8xf32>
      %78 = vector.extract_strided_slice %39 {offsets = [0, 16], sizes = [8, 8], strides = [1, 1]} : vector<8x32xf32> to vector<8x8xf32>
      %cst_60 = arith.constant dense<0.000000e+00> : vector<8x8xf32>
      %79 = tpu.matmul %76, %77, %cst_60 {dimension_numbers = #tpu.dot_dimension_numbers<[1], [1], [0], [0], [0, 0, 1, 0], [], []>} : vector<8x8xf32>, vector<8x8xf32>, vector<8x8xf32> -> vector<8x8xf32>
      %cst_61 = arith.constant dense<0xFF800000> : vector<8xf32>
      %80 = vector.multi_reduction <maximumf>, %79, %cst_61 [1] : vector<8x8xf32> to vector<8xf32>
      %81 = vector.shape_cast %80 : vector<8xf32> to vector<8x1xf32>
      %82 = vector.broadcast %81 : vector<8x1xf32> to vector<8x8xf32>
      %83 = arith.subf %79, %82 : vector<8x8xf32>
      %84 = math.exp %83 : vector<8x8xf32>
      %cst_62 = arith.constant dense<0.000000e+00> : vector<8xf32>
      %85 = vector.multi_reduction <add>, %84, %cst_62 [1] : vector<8x8xf32> to vector<8xf32>
      %86 = vector.shape_cast %85 : vector<8xf32> to vector<8x1xf32>
      %87 = tpu.reciprocal %86 {approx = true} : vector<8x1xf32> -> vector<8x1xf32>
      %88 = vector.broadcast %87 : vector<8x1xf32> to vector<8x8xf32>
      %89 = arith.mulf %84, %88 : vector<8x8xf32>
      %cst_63 = arith.constant dense<0.000000e+00> : vector<8x8xf32>
      %90 = tpu.matmul %89, %78, %cst_63 {dimension_numbers = #tpu.dot_dimension_numbers<[1], [0], [0], [1], [0, 0, 1, 1], [], []>} : vector<8x8xf32>, vector<8x8xf32>, vector<8x8xf32> -> vector<8x8xf32>
      %91 = vector.extract_strided_slice %37 {offsets = [0, 24], sizes = [8, 8], strides = [1, 1]} : vector<8x32xf32> to vector<8x8xf32>
      %cst_64 = arith.constant 0.353553385 : f32
      %92 = vector.broadcast %cst_64 : f32 to vector<8x8xf32>
      %93 = arith.mulf %91, %92 : vector<8x8xf32>
      %94 = vector.extract_strided_slice %38 {offsets = [0, 24], sizes = [8, 8], strides = [1, 1]} : vector<8x32xf32> to vector<8x8xf32>
      %95 = vector.extract_strided_slice %39 {offsets = [0, 24], sizes = [8, 8], strides = [1, 1]} : vector<8x32xf32> to vector<8x8xf32>
      %cst_65 = arith.constant dense<0.000000e+00> : vector<8x8xf32>
      %96 = tpu.matmul %93, %94, %cst_65 {dimension_numbers = #tpu.dot_dimension_numbers<[1], [1], [0], [0], [0, 0, 1, 0], [], []>} : vector<8x8xf32>, vector<8x8xf32>, vector<8x8xf32> -> vector<8x8xf32>
      %cst_66 = arith.constant dense<0xFF800000> : vector<8xf32>
      %97 = vector.multi_reduction <maximumf>, %96, %cst_66 [1] : vector<8x8xf32> to vector<8xf32>
      %98 = vector.shape_cast %97 : vector<8xf32> to vector<8x1xf32>
      %99 = vector.broadcast %98 : vector<8x1xf32> to vector<8x8xf32>
      %100 = arith.subf %96, %99 : vector<8x8xf32>
      %101 = math.exp %100 : vector<8x8xf32>
      %cst_67 = arith.constant dense<0.000000e+00> : vector<8xf32>
      %102 = vector.multi_reduction <add>, %101, %cst_67 [1] : vector<8x8xf32> to vector<8xf32>
      %103 = vector.shape_cast %102 : vector<8xf32> to vector<8x1xf32>
      %104 = tpu.reciprocal %103 {approx = true} : vector<8x1xf32> -> vector<8x1xf32>
      %105 = vector.broadcast %104 : vector<8x1xf32> to vector<8x8xf32>
      %106 = arith.mulf %101, %105 : vector<8x8xf32>
      %cst_68 = arith.constant dense<0.000000e+00> : vector<8x8xf32>
      %107 = tpu.matmul %106, %95, %cst_68 {dimension_numbers = #tpu.dot_dimension_numbers<[1], [0], [0], [1], [0, 0, 1, 1], [], []>} : vector<8x8xf32>, vector<8x8xf32>, vector<8x8xf32> -> vector<8x8xf32>
      %108 = tpu.concatenate %56, %73, %90, %107 in 1 : vector<8x8xf32>, vector<8x8xf32>, vector<8x8xf32>, vector<8x8xf32> -> vector<8x32xf32>
      %cst_69 = arith.constant dense<0.000000e+00> : vector<8x32xf32>
      %109 = tpu.matmul %108, %6, %cst_69 {dimension_numbers = #tpu.dot_dimension_numbers<[1], [0], [0], [1], [0, 0, 1, 1], [], []>} : vector<8x32xf32>, vector<32x32xf32>, vector<8x32xf32> -> vector<8x32xf32>
      %110 = vector.broadcast %7 : vector<1x32xf32> to vector<8x32xf32>
      %111 = arith.addf %109, %110 : vector<8x32xf32>
      %112 = arith.addf %arg25, %111 : vector<8x32xf32>
      %cst_70 = arith.constant dense<0.000000e+00> : vector<8xf32>
      %113 = vector.multi_reduction <add>, %112, %cst_70 [1] : vector<8x32xf32> to vector<8xf32>
      %114 = vector.shape_cast %113 : vector<8xf32> to vector<8x1xf32>
      %cst_71 = arith.constant 3.200000e+01 : f32
      %115 = vector.broadcast %cst_71 : f32 to vector<8x1xf32>
      %116 = arith.divf %114, %115 : vector<8x1xf32>
      %117 = vector.broadcast %116 : vector<8x1xf32> to vector<8x32xf32>
      %118 = arith.subf %112, %117 : vector<8x32xf32>
      %119 = arith.mulf %118, %118 : vector<8x32xf32>
      %cst_72 = arith.constant dense<0.000000e+00> : vector<8xf32>
      %120 = vector.multi_reduction <add>, %119, %cst_72 [1] : vector<8x32xf32> to vector<8xf32>
      %121 = vector.shape_cast %120 : vector<8xf32> to vector<8x1xf32>
      %cst_73 = arith.constant 3.200000e+01 : f32
      %122 = vector.broadcast %cst_73 : f32 to vector<8x1xf32>
      %123 = arith.divf %121, %122 : vector<8x1xf32>
      %124 = vector.broadcast %116 : vector<8x1xf32> to vector<8x32xf32>
      %125 = arith.subf %112, %124 : vector<8x32xf32>
      %cst_74 = arith.constant 9.99999974E-6 : f32
      %126 = vector.broadcast %cst_74 : f32 to vector<8x1xf32>
      %127 = arith.addf %123, %126 : vector<8x1xf32>
      %128 = math.rsqrt %127 : vector<8x1xf32>
      %129 = vector.broadcast %128 : vector<8x1xf32> to vector<8x32xf32>
      %130 = arith.mulf %125, %129 : vector<8x32xf32>
      %131 = vector.broadcast %18 : vector<1x32xf32> to vector<8x32xf32>
      %132 = arith.mulf %130, %131 : vector<8x32xf32>
      %133 = vector.broadcast %19 : vector<1x32xf32> to vector<8x32xf32>
      %134 = arith.addf %132, %133 : vector<8x32xf32>
      %cst_75 = arith.constant dense<0.000000e+00> : vector<8x32xf32>
      %135 = tpu.matmul %134, %8, %cst_75 {dimension_numbers = #tpu.dot_dimension_numbers<[1], [0], [0], [1], [0, 0, 1, 1], [], []>} : vector<8x32xf32>, vector<32x32xf32>, vector<8x32xf32> -> vector<8x32xf32>
      %136 = vector.broadcast %9 : vector<1x32xf32> to vector<8x32xf32>
      %137 = arith.addf %135, %136 : vector<8x32xf32>
      %138 = vector.extract_strided_slice %137 {offsets = [0, 0], sizes = [8, 8], strides = [1, 1]} : vector<8x32xf32> to vector<8x8xf32>
      %cst_76 = arith.constant 0.353553385 : f32
      %139 = vector.broadcast %cst_76 : f32 to vector<8x8xf32>
      %140 = arith.mulf %138, %139 : vector<8x8xf32>
      %141 = vector.extract_strided_slice %27 {offsets = [0, 0], sizes = [16, 8], strides = [1, 1]} : vector<16x32xf32> to vector<16x8xf32>
      %142 = vector.extract_strided_slice %28 {offsets = [0, 0], sizes = [16, 8], strides = [1, 1]} : vector<16x32xf32> to vector<16x8xf32>
      %cst_77 = arith.constant dense<0.000000e+00> : vector<8x16xf32>
      %143 = tpu.matmul %140, %141, %cst_77 {dimension_numbers = #tpu.dot_dimension_numbers<[1], [1], [0], [0], [0, 0, 1, 0], [], []>} : vector<8x8xf32>, vector<16x8xf32>, vector<8x16xf32> -> vector<8x16xf32>
      %cst_78 = arith.constant dense<0xFF800000> : vector<8xf32>
      %144 = vector.multi_reduction <maximumf>, %143, %cst_78 [1] : vector<8x16xf32> to vector<8xf32>
      %145 = vector.shape_cast %144 : vector<8xf32> to vector<8x1xf32>
      %146 = vector.broadcast %145 : vector<8x1xf32> to vector<8x16xf32>
      %147 = arith.subf %143, %146 : vector<8x16xf32>
      %148 = math.exp %147 : vector<8x16xf32>
      %cst_79 = arith.constant dense<0.000000e+00> : vector<8xf32>
      %149 = vector.multi_reduction <add>, %148, %cst_79 [1] : vector<8x16xf32> to vector<8xf32>
      %150 = vector.shape_cast %149 : vector<8xf32> to vector<8x1xf32>
      %151 = tpu.reciprocal %150 {approx = true} : vector<8x1xf32> -> vector<8x1xf32>
      %152 = vector.broadcast %151 : vector<8x1xf32> to vector<8x16xf32>
      %153 = arith.mulf %148, %152 : vector<8x16xf32>
      %cst_80 = arith.constant dense<0.000000e+00> : vector<8x8xf32>
      %154 = tpu.matmul %153, %142, %cst_80 {dimension_numbers = #tpu.dot_dimension_numbers<[1], [0], [0], [1], [0, 0, 1, 1], [], []>} : vector<8x16xf32>, vector<16x8xf32>, vector<8x8xf32> -> vector<8x8xf32>
      %155 = vector.extract_strided_slice %137 {offsets = [0, 8], sizes = [8, 8], strides = [1, 1]} : vector<8x32xf32> to vector<8x8xf32>
      %cst_81 = arith.constant 0.353553385 : f32
      %156 = vector.broadcast %cst_81 : f32 to vector<8x8xf32>
      %157 = arith.mulf %155, %156 : vector<8x8xf32>
      %158 = vector.extract_strided_slice %27 {offsets = [0, 8], sizes = [16, 8], strides = [1, 1]} : vector<16x32xf32> to vector<16x8xf32>
      %159 = vector.extract_strided_slice %28 {offsets = [0, 8], sizes = [16, 8], strides = [1, 1]} : vector<16x32xf32> to vector<16x8xf32>
      %cst_82 = arith.constant dense<0.000000e+00> : vector<8x16xf32>
      %160 = tpu.matmul %157, %158, %cst_82 {dimension_numbers = #tpu.dot_dimension_numbers<[1], [1], [0], [0], [0, 0, 1, 0], [], []>} : vector<8x8xf32>, vector<16x8xf32>, vector<8x16xf32> -> vector<8x16xf32>
      %cst_83 = arith.constant dense<0xFF800000> : vector<8xf32>
      %161 = vector.multi_reduction <maximumf>, %160, %cst_83 [1] : vector<8x16xf32> to vector<8xf32>
      %162 = vector.shape_cast %161 : vector<8xf32> to vector<8x1xf32>
      %163 = vector.broadcast %162 : vector<8x1xf32> to vector<8x16xf32>
      %164 = arith.subf %160, %163 : vector<8x16xf32>
      %165 = math.exp %164 : vector<8x16xf32>
      %cst_84 = arith.constant dense<0.000000e+00> : vector<8xf32>
      %166 = vector.multi_reduction <add>, %165, %cst_84 [1] : vector<8x16xf32> to vector<8xf32>
      %167 = vector.shape_cast %166 : vector<8xf32> to vector<8x1xf32>
      %168 = tpu.reciprocal %167 {approx = true} : vector<8x1xf32> -> vector<8x1xf32>
      %169 = vector.broadcast %168 : vector<8x1xf32> to vector<8x16xf32>
      %170 = arith.mulf %165, %169 : vector<8x16xf32>
      %cst_85 = arith.constant dense<0.000000e+00> : vector<8x8xf32>
      %171 = tpu.matmul %170, %159, %cst_85 {dimension_numbers = #tpu.dot_dimension_numbers<[1], [0], [0], [1], [0, 0, 1, 1], [], []>} : vector<8x16xf32>, vector<16x8xf32>, vector<8x8xf32> -> vector<8x8xf32>
      %172 = vector.extract_strided_slice %137 {offsets = [0, 16], sizes = [8, 8], strides = [1, 1]} : vector<8x32xf32> to vector<8x8xf32>
      %cst_86 = arith.constant 0.353553385 : f32
      %173 = vector.broadcast %cst_86 : f32 to vector<8x8xf32>
      %174 = arith.mulf %172, %173 : vector<8x8xf32>
      %175 = vector.extract_strided_slice %27 {offsets = [0, 16], sizes = [16, 8], strides = [1, 1]} : vector<16x32xf32> to vector<16x8xf32>
      %176 = vector.extract_strided_slice %28 {offsets = [0, 16], sizes = [16, 8], strides = [1, 1]} : vector<16x32xf32> to vector<16x8xf32>
      %cst_87 = arith.constant dense<0.000000e+00> : vector<8x16xf32>
      %177 = tpu.matmul %174, %175, %cst_87 {dimension_numbers = #tpu.dot_dimension_numbers<[1], [1], [0], [0], [0, 0, 1, 0], [], []>} : vector<8x8xf32>, vector<16x8xf32>, vector<8x16xf32> -> vector<8x16xf32>
      %cst_88 = arith.constant dense<0xFF800000> : vector<8xf32>
      %178 = vector.multi_reduction <maximumf>, %177, %cst_88 [1] : vector<8x16xf32> to vector<8xf32>
      %179 = vector.shape_cast %178 : vector<8xf32> to vector<8x1xf32>
      %180 = vector.broadcast %179 : vector<8x1xf32> to vector<8x16xf32>
      %181 = arith.subf %177, %180 : vector<8x16xf32>
      %182 = math.exp %181 : vector<8x16xf32>
      %cst_89 = arith.constant dense<0.000000e+00> : vector<8xf32>
      %183 = vector.multi_reduction <add>, %182, %cst_89 [1] : vector<8x16xf32> to vector<8xf32>
      %184 = vector.shape_cast %183 : vector<8xf32> to vector<8x1xf32>
      %185 = tpu.reciprocal %184 {approx = true} : vector<8x1xf32> -> vector<8x1xf32>
      %186 = vector.broadcast %185 : vector<8x1xf32> to vector<8x16xf32>
      %187 = arith.mulf %182, %186 : vector<8x16xf32>
      %cst_90 = arith.constant dense<0.000000e+00> : vector<8x8xf32>
      %188 = tpu.matmul %187, %176, %cst_90 {dimension_numbers = #tpu.dot_dimension_numbers<[1], [0], [0], [1], [0, 0, 1, 1], [], []>} : vector<8x16xf32>, vector<16x8xf32>, vector<8x8xf32> -> vector<8x8xf32>
      %189 = vector.extract_strided_slice %137 {offsets = [0, 24], sizes = [8, 8], strides = [1, 1]} : vector<8x32xf32> to vector<8x8xf32>
      %cst_91 = arith.constant 0.353553385 : f32
      %190 = vector.broadcast %cst_91 : f32 to vector<8x8xf32>
      %191 = arith.mulf %189, %190 : vector<8x8xf32>
      %192 = vector.extract_strided_slice %27 {offsets = [0, 24], sizes = [16, 8], strides = [1, 1]} : vector<16x32xf32> to vector<16x8xf32>
      %193 = vector.extract_strided_slice %28 {offsets = [0, 24], sizes = [16, 8], strides = [1, 1]} : vector<16x32xf32> to vector<16x8xf32>
      %cst_92 = arith.constant dense<0.000000e+00> : vector<8x16xf32>
      %194 = tpu.matmul %191, %192, %cst_92 {dimension_numbers = #tpu.dot_dimension_numbers<[1], [1], [0], [0], [0, 0, 1, 0], [], []>} : vector<8x8xf32>, vector<16x8xf32>, vector<8x16xf32> -> vector<8x16xf32>
      %cst_93 = arith.constant dense<0xFF800000> : vector<8xf32>
      %195 = vector.multi_reduction <maximumf>, %194, %cst_93 [1] : vector<8x16xf32> to vector<8xf32>
      %196 = vector.shape_cast %195 : vector<8xf32> to vector<8x1xf32>
      %197 = vector.broadcast %196 : vector<8x1xf32> to vector<8x16xf32>
      %198 = arith.subf %194, %197 : vector<8x16xf32>
      %199 = math.exp %198 : vector<8x16xf32>
      %cst_94 = arith.constant dense<0.000000e+00> : vector<8xf32>
      %200 = vector.multi_reduction <add>, %199, %cst_94 [1] : vector<8x16xf32> to vector<8xf32>
      %201 = vector.shape_cast %200 : vector<8xf32> to vector<8x1xf32>
      %202 = tpu.reciprocal %201 {approx = true} : vector<8x1xf32> -> vector<8x1xf32>
      %203 = vector.broadcast %202 : vector<8x1xf32> to vector<8x16xf32>
      %204 = arith.mulf %199, %203 : vector<8x16xf32>
      %cst_95 = arith.constant dense<0.000000e+00> : vector<8x8xf32>
      %205 = tpu.matmul %204, %193, %cst_95 {dimension_numbers = #tpu.dot_dimension_numbers<[1], [0], [0], [1], [0, 0, 1, 1], [], []>} : vector<8x16xf32>, vector<16x8xf32>, vector<8x8xf32> -> vector<8x8xf32>
      %206 = tpu.concatenate %154, %171, %188, %205 in 1 : vector<8x8xf32>, vector<8x8xf32>, vector<8x8xf32>, vector<8x8xf32> -> vector<8x32xf32>
      %cst_96 = arith.constant dense<0.000000e+00> : vector<8x32xf32>
      %207 = tpu.matmul %206, %12, %cst_96 {dimension_numbers = #tpu.dot_dimension_numbers<[1], [0], [0], [1], [0, 0, 1, 1], [], []>} : vector<8x32xf32>, vector<32x32xf32>, vector<8x32xf32> -> vector<8x32xf32>
      %208 = vector.broadcast %13 : vector<1x32xf32> to vector<8x32xf32>
      %209 = arith.addf %207, %208 : vector<8x32xf32>
      %210 = arith.addf %134, %209 : vector<8x32xf32>
      %cst_97 = arith.constant dense<0.000000e+00> : vector<8xf32>
      %211 = vector.multi_reduction <add>, %210, %cst_97 [1] : vector<8x32xf32> to vector<8xf32>
      %212 = vector.shape_cast %211 : vector<8xf32> to vector<8x1xf32>
      %cst_98 = arith.constant 3.200000e+01 : f32
      %213 = vector.broadcast %cst_98 : f32 to vector<8x1xf32>
      %214 = arith.divf %212, %213 : vector<8x1xf32>
      %215 = vector.broadcast %214 : vector<8x1xf32> to vector<8x32xf32>
      %216 = arith.subf %210, %215 : vector<8x32xf32>
      %217 = arith.mulf %216, %216 : vector<8x32xf32>
      %cst_99 = arith.constant dense<0.000000e+00> : vector<8xf32>
      %218 = vector.multi_reduction <add>, %217, %cst_99 [1] : vector<8x32xf32> to vector<8xf32>
      %219 = vector.shape_cast %218 : vector<8xf32> to vector<8x1xf32>
      %cst_100 = arith.constant 3.200000e+01 : f32
      %220 = vector.broadcast %cst_100 : f32 to vector<8x1xf32>
      %221 = arith.divf %219, %220 : vector<8x1xf32>
      %222 = vector.broadcast %214 : vector<8x1xf32> to vector<8x32xf32>
      %223 = arith.subf %210, %222 : vector<8x32xf32>
      %cst_101 = arith.constant 9.99999974E-6 : f32
      %224 = vector.broadcast %cst_101 : f32 to vector<8x1xf32>
      %225 = arith.addf %221, %224 : vector<8x1xf32>
      %226 = math.rsqrt %225 : vector<8x1xf32>
      %227 = vector.broadcast %226 : vector<8x1xf32> to vector<8x32xf32>
      %228 = arith.mulf %223, %227 : vector<8x32xf32>
      %229 = vector.broadcast %20 : vector<1x32xf32> to vector<8x32xf32>
      %230 = arith.mulf %228, %229 : vector<8x32xf32>
      %231 = vector.broadcast %21 : vector<1x32xf32> to vector<8x32xf32>
      %232 = arith.addf %230, %231 : vector<8x32xf32>
      %cst_102 = arith.constant dense<0.000000e+00> : vector<8x64xf32>
      %233 = tpu.matmul %232, %14, %cst_102 {dimension_numbers = #tpu.dot_dimension_numbers<[1], [0], [0], [1], [0, 0, 1, 1], [], []>} : vector<8x32xf32>, vector<32x64xf32>, vector<8x64xf32> -> vector<8x64xf32>
      %234 = vector.broadcast %15 : vector<1x64xf32> to vector<8x64xf32>
      %235 = arith.addf %233, %234 : vector<8x64xf32>
      %cst_103 = arith.constant 0.000000e+00 : f32
      %236 = vector.broadcast %cst_103 : f32 to vector<8x64xf32>
      %237 = arith.maximumf %235, %236 : vector<8x64xf32>
      %cst_104 = arith.constant dense<0.000000e+00> : vector<8x32xf32>
      %238 = tpu.matmul %237, %16, %cst_104 {dimension_numbers = #tpu.dot_dimension_numbers<[1], [0], [0], [1], [0, 0, 1, 1], [], []>} : vector<8x64xf32>, vector<64x32xf32>, vector<8x32xf32> -> vector<8x32xf32>
      %239 = vector.broadcast %17 : vector<1x32xf32> to vector<8x32xf32>
      %240 = arith.addf %238, %239 : vector<8x32xf32>
      %241 = arith.addf %232, %240 : vector<8x32xf32>
      %cst_105 = arith.constant dense<0.000000e+00> : vector<8xf32>
      %242 = vector.multi_reduction <add>, %241, %cst_105 [1] : vector<8x32xf32> to vector<8xf32>
      %243 = vector.shape_cast %242 : vector<8xf32> to vector<8x1xf32>
      %cst_106 = arith.constant 3.200000e+01 : f32
      %244 = vector.broadcast %cst_106 : f32 to vector<8x1xf32>
      %245 = arith.divf %243, %244 : vector<8x1xf32>
      %246 = vector.broadcast %245 : vector<8x1xf32> to vector<8x32xf32>
      %247 = arith.subf %241, %246 : vector<8x32xf32>
      %248 = arith.mulf %247, %247 : vector<8x32xf32>
      %cst_107 = arith.constant dense<0.000000e+00> : vector<8xf32>
      %249 = vector.multi_reduction <add>, %248, %cst_107 [1] : vector<8x32xf32> to vector<8xf32>
      %250 = vector.shape_cast %249 : vector<8xf32> to vector<8x1xf32>
      %cst_108 = arith.constant 3.200000e+01 : f32
      %251 = vector.broadcast %cst_108 : f32 to vector<8x1xf32>
      %252 = arith.divf %250, %251 : vector<8x1xf32>
      %253 = vector.broadcast %245 : vector<8x1xf32> to vector<8x32xf32>
      %254 = arith.subf %241, %253 : vector<8x32xf32>
      %cst_109 = arith.constant 9.99999974E-6 : f32
      %255 = vector.broadcast %cst_109 : f32 to vector<8x1xf32>
      %256 = arith.addf %252, %255 : vector<8x1xf32>
      %257 = math.rsqrt %256 : vector<8x1xf32>
      %258 = vector.broadcast %257 : vector<8x1xf32> to vector<8x32xf32>
      %259 = arith.mulf %254, %258 : vector<8x32xf32>
      %260 = vector.broadcast %22 : vector<1x32xf32> to vector<8x32xf32>
      %261 = arith.mulf %259, %260 : vector<8x32xf32>
      %262 = vector.broadcast %23 : vector<1x32xf32> to vector<8x32xf32>
      %263 = arith.addf %261, %262 : vector<8x32xf32>
      scf.yield %263 : vector<8x32xf32>
    }
    %c0_45 = arith.constant 0 : index
    %c0_46 = arith.constant 0 : index
    %c0_47 = arith.constant 0 : index
    %31 = vector.load %arg23[%c0_45, %c0_46, %c0_47] : memref<1x8x32xf32, #tpu.memory_space<vmem>>, vector<1x8x32xf32>
    %32 = vector.shape_cast %31 : vector<1x8x32xf32> to vector<8x32xf32>
    %33 = vector.shape_cast %30 : vector<8x32xf32> to vector<1x8x32xf32>
    tpu.vector_store %arg23[%c0_45, %c0_46, %c0_47], %33 {strides = array<i32>} : memref<1x8x32xf32, #tpu.memory_space<vmem>>, vector<1x8x32xf32>,
    return
  }
  func.func @transform_0(%arg0: i32) -> (i32, i32, i32) {
    %c0_i32 = arith.constant 0 : i32
    %c0_i32_0 = arith.constant 0 : i32
    %c0_i32_1 = arith.constant 0 : i32
    return %arg0, %c0_i32, %c0_i32_0 : i32, i32, i32
  }
  func.func @transform_1(%arg0: i32) -> (i32, i32, i32) {
    %c0_i32 = arith.constant 0 : i32
    %c0_i32_0 = arith.constant 0 : i32
    %c0_i32_1 = arith.constant 0 : i32
    return %arg0, %c0_i32, %c0_i32_0 : i32, i32, i32
  }
  func.func @transform_2(%arg0: i32) -> (i32, i32) {
    %c0_i32 = arith.constant 0 : i32
    %c0_i32_0 = arith.constant 0 : i32
    %c0_i32_1 = arith.constant 0 : i32
    return %c0_i32, %c0_i32_0 : i32, i32
  }
  func.func @transform_3(%arg0: i32) -> (i32, i32) {
    %c0_i32 = arith.constant 0 : i32
    %c0_i32_0 = arith.constant 0 : i32
    %c0_i32_1 = arith.constant 0 : i32
    return %c0_i32, %c0_i32_0 : i32, i32
  }
  func.func @transform_4(%arg0: i32) -> (i32, i32) {
    %c0_i32 = arith.constant 0 : i32
    %c0_i32_0 = arith.constant 0 : i32
    %c0_i32_1 = arith.constant 0 : i32
    return %c0_i32, %c0_i32_0 : i32, i32
  }
  func.func @transform_5(%arg0: i32) -> (i32, i32) {
    %c0_i32 = arith.constant 0 : i32
    %c0_i32_0 = arith.constant 0 : i32
    %c0_i32_1 = arith.constant 0 : i32
    return %c0_i32, %c0_i32_0 : i32, i32
  }
  func.func @transform_6(%arg0: i32) -> (i32, i32) {
    %c0_i32 = arith.constant 0 : i32
    %c0_i32_0 = arith.constant 0 : i32
    %c0_i32_1 = arith.constant 0 : i32
    return %c0_i32, %c0_i32_0 : i32, i32
  }
  func.func @transform_7(%arg0: i32) -> (i32, i32) {
    %c0_i32 = arith.constant 0 : i32
    %c0_i32_0 = arith.constant 0 : i32
    %c0_i32_1 = arith.constant 0 : i32
    return %c0_i32, %c0_i32_0 : i32, i32
  }
  func.func @transform_8(%arg0: i32) -> (i32, i32) {
    %c0_i32 = arith.constant 0 : i32
    %c0_i32_0 = arith.constant 0 : i32
    %c0_i32_1 = arith.constant 0 : i32
    return %c0_i32, %c0_i32_0 : i32, i32
  }
  func.func @transform_9(%arg0: i32) -> (i32, i32) {
    %c0_i32 = arith.constant 0 : i32
    %c0_i32_0 = arith.constant 0 : i32
    %c0_i32_1 = arith.constant 0 : i32
    return %c0_i32, %c0_i32_0 : i32, i32
  }
  func.func @transform_10(%arg0: i32) -> (i32, i32) {
    %c0_i32 = arith.constant 0 : i32
    %c0_i32_0 = arith.constant 0 : i32
    %c0_i32_1 = arith.constant 0 : i32
    return %c0_i32, %c0_i32_0 : i32, i32
  }
  func.func @transform_11(%arg0: i32) -> (i32, i32) {
    %c0_i32 = arith.constant 0 : i32
    %c0_i32_0 = arith.constant 0 : i32
    %c0_i32_1 = arith.constant 0 : i32
    return %c0_i32, %c0_i32_0 : i32, i32
  }
  func.func @transform_12(%arg0: i32) -> (i32, i32) {
    %c0_i32 = arith.constant 0 : i32
    %c0_i32_0 = arith.constant 0 : i32
    %c0_i32_1 = arith.constant 0 : i32
    return %c0_i32, %c0_i32_0 : i32, i32
  }
  func.func @transform_13(%arg0: i32) -> (i32, i32) {
    %c0_i32 = arith.constant 0 : i32
    %c0_i32_0 = arith.constant 0 : i32
    %c0_i32_1 = arith.constant 0 : i32
    return %c0_i32, %c0_i32_0 : i32, i32
  }
  func.func @transform_14(%arg0: i32) -> (i32, i32) {
    %c0_i32 = arith.constant 0 : i32
    %c0_i32_0 = arith.constant 0 : i32
    %c0_i32_1 = arith.constant 0 : i32
    return %c0_i32, %c0_i32_0 : i32, i32
  }
  func.func @transform_15(%arg0: i32) -> (i32, i32) {
    %c0_i32 = arith.constant 0 : i32
    %c0_i32_0 = arith.constant 0 : i32
    %c0_i32_1 = arith.constant 0 : i32
    return %c0_i32, %c0_i32_0 : i32, i32
  }
  func.func @transform_16(%arg0: i32) -> (i32, i32) {
    %c0_i32 = arith.constant 0 : i32
    %c0_i32_0 = arith.constant 0 : i32
    %c0_i32_1 = arith.constant 0 : i32
    return %c0_i32, %c0_i32_0 : i32, i32
  }
  func.func @transform_17(%arg0: i32) -> (i32, i32) {
    %c0_i32 = arith.constant 0 : i32
    %c0_i32_0 = arith.constant 0 : i32
    %c0_i32_1 = arith.constant 0 : i32
    return %c0_i32, %c0_i32_0 : i32, i32
  }
  func.func @transform_18(%arg0: i32) -> (i32, i32) {
    %c0_i32 = arith.constant 0 : i32
    %c0_i32_0 = arith.constant 0 : i32
    %c0_i32_1 = arith.constant 0 : i32
    return %c0_i32, %c0_i32_0 : i32, i32
  }
  func.func @transform_19(%arg0: i32) -> (i32, i32) {
    %c0_i32 = arith.constant 0 : i32
    %c0_i32_0 = arith.constant 0 : i32
    %c0_i32_1 = arith.constant 0 : i32
    return %c0_i32, %c0_i32_0 : i32, i32
  }
  func.func @transform_20(%arg0: i32) -> (i32, i32) {
    %c0_i32 = arith.constant 0 : i32
    %c0_i32_0 = arith.constant 0 : i32
    %c0_i32_1 = arith.constant 0 : i32
    return %c0_i32, %c0_i32_0 : i32, i32
  }
  func.func @transform_21(%arg0: i32) -> (i32, i32) {
    %c0_i32 = arith.constant 0 : i32
    %c0_i32_0 = arith.constant 0 : i32
    %c0_i32_1 = arith.constant 0 : i32
    return %c0_i32, %c0_i32_0 : i32, i32
  }
  func.func @transform_22(%arg0: i32) -> (i32, i32, i32) {
    %c0_i32 = arith.constant 0 : i32
    %c0_i32_0 = arith.constant 0 : i32
    %c0_i32_1 = arith.constant 0 : i32
    return %arg0, %c0_i32, %c0_i32_0 : i32, i32, i32
  }
}

</mosaic_0001>

<llo_original>
// kernel: tpu_custom_call.1
$region0: #{tpu_custom_call.1}
  #allocation0 [shape = 'u32[]', space=smem, size = 0x4, offset = 0x4, fixed_abs, tag = 'smem constant byte address 0x4 - core index']
  #allocation1 [shape = 'u32[72,128]{1,0:T(1,128)}', space=vmem, size = 0x9000, scoped, tag = 'internal scratch']
  %s0 = inlined_call_operand.hbm [shape: f32[2,8,32], index: 0, kind: input, shape index: {}]
  %s1 = inlined_call_operand.vmem [shape: f32[2,16,32], index: 1, kind: input, shape index: {}]
  %s2 = inlined_call_operand.vmem [shape: f32[32,96], index: 2, kind: input, shape index: {}]
  %s3 = inlined_call_operand.vmem [shape: f32[1,96], index: 3, kind: input, shape index: {}]
  %s4 = inlined_call_operand.vmem [shape: f32[32,32], index: 4, kind: input, shape index: {}]
  %s5 = inlined_call_operand.vmem [shape: f32[1,32], index: 5, kind: input, shape index: {}]
  %s6 = inlined_call_operand.hbm [shape: f32[32,32], index: 6, kind: input, shape index: {}]
  %s7 = inlined_call_operand.vmem [shape: f32[1,32], index: 7, kind: input, shape index: {}]
  %s8 = inlined_call_operand.hbm [shape: f32[32,64], index: 8, kind: input, shape index: {}]
  %s9 = inlined_call_operand.vmem [shape: f32[1,64], index: 9, kind: input, shape index: {}]
  %s10 = inlined_call_operand.hbm [shape: f32[32,32], index: 10, kind: input, shape index: {}]
  %s11 = inlined_call_operand.vmem [shape: f32[1,32], index: 11, kind: input, shape index: {}]
  %s12 = inlined_call_operand.hbm [shape: f32[32,64], index: 12, kind: input, shape index: {}]
  %s13 = inlined_call_operand.vmem [shape: f32[1,64], index: 13, kind: input, shape index: {}]
  %s14 = inlined_call_operand.vmem [shape: f32[64,32], index: 14, kind: input, shape index: {}]
  %s15 = inlined_call_operand.vmem [shape: f32[1,32], index: 15, kind: input, shape index: {}]
  %s16 = inlined_call_operand.vmem [shape: f32[1,32], index: 16, kind: input, shape index: {}]
  %s17 = inlined_call_operand.vmem [shape: f32[1,32], index: 17, kind: input, shape index: {}]
  %s18 = inlined_call_operand.vmem [shape: f32[1,32], index: 18, kind: input, shape index: {}]
  %s19 = inlined_call_operand.vmem [shape: f32[1,32], index: 19, kind: input, shape index: {}]
  %s20 = inlined_call_operand.vmem [shape: f32[1,32], index: 20, kind: input, shape index: {}]
  %s21 = inlined_call_operand.vmem [shape: f32[1,32], index: 21, kind: input, shape index: {}]
  %s22 = inlined_call_operand.hbm [shape: f32[2,8,32], index: 22, kind: output, shape index: {}]
  %s23 = sld [smem:[#allocation0]]
  $region148: #{tpu_custom_call.1} parent=0
    _
  %s25 = ssub.s32 1, %s23
  %s26 = scalar_select 0, %s25, %s23
  $region1: #{tpu_custom_call.1} parent=0
    #allocation2 [shape = 'u8[8192]{0}', space=vmem, size = 0x2000, scoped, tag = 'input window, operand 0']
    #allocation3 [shape = 's32[2]{0}', space=sflag, size = 0x8, scoped, tag = 'scoped memory for tpu_custom_call.1']
    #allocation4 [shape = 's32[2]{0}', space=sflag, size = 0x8, scoped, tag = 'scoped memory for tpu_custom_call.1']
    #allocation5 [shape = 'u8[16384]{0}', space=vmem, size = 0x4000, scoped, tag = 'input window, operand 6, single buffered']
    #allocation6 [shape = 's32[1]{0}', space=sflag, size = 0x4, scoped, tag = 'scoped memory for tpu_custom_call.1']
    #allocation7 [shape = 'u8[16384]{0}', space=vmem, size = 0x4000, scoped, tag = 'input window, operand 8, single buffered']
    #allocation8 [shape = 'u8[16384]{0}', space=vmem, size = 0x4000, scoped, tag = 'input window, operand 10, single buffered']
    #allocation9 [shape = 's32[1]{0}', space=sflag, size = 0x4, scoped, tag = 'scoped memory for tpu_custom_call.1']
    #allocation10 [shape = 'u8[16384]{0}', space=vmem, size = 0x4000, scoped, tag = 'input window, operand 12, single buffered']
    #allocation11 [shape = 'u8[8192]{0}', space=vmem, size = 0x2000, scoped, tag = 'output window, operand 0']
    %27 = vsyncpa [#allocation3], 0
    %s28 = scalar_lea.sflag [#allocation3], 1
    %29 = vsyncpa %s28, 0
    %30 = vsyncpa [#allocation6], 0
    %31 = vsyncpa [#allocation9], 0
    %32 = vsyncpa [#allocation4], 0
    %s33 = scalar_lea.sflag [#allocation4], 1
    %34 = vsyncpa %s33, 0
    loop: start=0, step=1, limit=4
    $region2: #{tpu_custom_call.1} parent=1 // loop_pre_header
      _
    $region3: #{tpu_custom_call.1} parent=1 // loop_header
      %s36 = sphi 0, %s40
      %p37 = scmp.ge.s32.totalorder %s36, 4
      %s46 = sphi 0, %s48
      %s49 = sphi 0, %s46
      %s50 = sphi 0, %s49
      %s66 = sphi 0, %s50
      %s72 = sphi 0, %s74
      %s75 = sphi 0, %s72
      %s76 = sphi 0, %s75
      %s92 = sphi 0, %s76
      %s96 = sphi 0, %s96
      %s98 = sphi 0, %s96
      %s99 = sphi 0, %s98
      %s113 = sphi 0, %s99
      %s117 = sphi 0, %s117
      %s119 = sphi 0, %s117
      %s120 = sphi 0, %s119
      %s134 = sphi 0, %s120
      %s138 = sphi 0, %s138
      %s140 = sphi 0, %s138
      %s141 = sphi 0, %s140
      %s155 = sphi 0, %s141
      %s159 = sphi 0, %s159
      %s161 = sphi 0, %s159
      %s162 = sphi 0, %s161
      %s176 = sphi 0, %s162
      %s180 = sphi 0, %s180
      %s182 = sphi 0, %s180
      %s183 = sphi 0, %s182
      %s197 = sphi 0, %s183
      %s201 = sphi 0, %s201
      %s203 = sphi 0, %s201
      %s204 = sphi 0, %s203
      %s218 = sphi 0, %s204
      %s222 = sphi 0, %s222
      %s224 = sphi 0, %s222
      %s225 = sphi 0, %s224
      %s239 = sphi 0, %s225
      %s243 = sphi 0, %s243
      %s245 = sphi 0, %s243
      %s246 = sphi 0, %s245
      %s260 = sphi 0, %s246
      %s264 = sphi 0, %s264
      %s266 = sphi 0, %s264
      %s267 = sphi 0, %s266
      %s281 = sphi 0, %s267
      %s285 = sphi 0, %s285
      %s287 = sphi 0, %s285
      %s288 = sphi 0, %s287
      %s302 = sphi 0, %s288
      %s306 = sphi 0, %s306
      %s308 = sphi 0, %s306
      %s309 = sphi 0, %s308
      %s323 = sphi 0, %s309
      %s327 = sphi 0, %s327
      %s329 = sphi 0, %s327
      %s330 = sphi 0, %s329
      %s344 = sphi 0, %s330
      %s348 = sphi 0, %s348
      %s350 = sphi 0, %s348
      %s351 = sphi 0, %s350
      %s365 = sphi 0, %s351
      %s369 = sphi 0, %s369
      %s371 = sphi 0, %s369
      %s372 = sphi 0, %s371
      %s386 = sphi 0, %s372
      %s390 = sphi 0, %s390
      %s392 = sphi 0, %s390
      %s393 = sphi 0, %s392
      %s407 = sphi 0, %s393
      %s411 = sphi 0, %s411
      %s413 = sphi 0, %s411
      %s414 = sphi 0, %s413
      %s428 = sphi 0, %s414
      %s432 = sphi 0, %s432
      %s434 = sphi 0, %s432
      %s435 = sphi 0, %s434
      %s449 = sphi 0, %s435
      %s453 = sphi 0, %s453
      %s455 = sphi 0, %s453
      %s456 = sphi 0, %s455
      %s470 = sphi 0, %s456
      %s474 = sphi 0, %s474
      %s476 = sphi 0, %s474
      %s477 = sphi 0, %s476
      %s491 = sphi 0, %s477
      %s495 = sphi 0, %s495
      %s497 = sphi 0, %s495
      %s498 = sphi 0, %s497
      %s512 = sphi 0, %s498
      %s518 = sphi 0, %s520
      %s521 = sphi 0, %s518
      %s522 = sphi 0, %s521
      %s538 = sphi 0, %s522
    $region4: #{tpu_custom_call.1} parent=1 // loop_header_branch
      %39 = sbr.rel (%p37) target = $region8
    $region5: #{tpu_custom_call.1} parent=1 // loop_body
      %s41 = ssub.s32 %s36, 1
      %s42 = ssub.s32 %s36, 2
      %s43 = sadd.s32 %s36, 1
      %s44 = ssub.s32 %s36, %s43
      %p45 = scmp.eq.s32.totalorder %s44, 0
      %s47 = sadd.s32 %s46, 1
      %s48 = scalar_select %p45, %s46, %s47
      %p51 = pneg %p45
      %p52 = scmp.eq.s32.totalorder %s36, 1
      %p53 = por %p51, %p52
      %p54 = scmp.ne.s32.totalorder %s46, %s49
      %p55 = scmp.eq.s32.totalorder %s36, 0
      %p56 = por %p54, %p55
      %p57 = scmp.ne.s32.totalorder %s46, %s49
      %p58 = scmp.eq.s32.totalorder %s41, 1
      %p59 = por %p57, %p58
      %p60 = scmp.ne.s32.totalorder %s49, %s50
      %p61 = scmp.eq.s32.totalorder %s41, 0
      %p62 = por %p60, %p61
      %p63 = scmp.ne.s32.totalorder %s49, %s50
      %p64 = scmp.eq.s32.totalorder %s42, 1
      %p65 = por %p63, %p64
      %p67 = scmp.ne.s32.totalorder %s50, %s66
      %p68 = scmp.eq.s32.totalorder %s42, 0
      %p69 = por %p67, %p68
      %s70 = ssub.s32 %s36, %s43
      %p71 = scmp.eq.s32.totalorder %s70, 0
      %s73 = sadd.s32 %s72, 1
      %s74 = scalar_select %p71, %s72, %s73
      %p77 = pneg %p71
      %p78 = scmp.eq.s32.totalorder %s36, 1
      %p79 = por %p77, %p78
      %p80 = scmp.ne.s32.totalorder %s72, %s75
      %p81 = scmp.eq.s32.totalorder %s36, 0
      %p82 = por %p80, %p81
      %p83 = scmp.ne.s32.totalorder %s72, %s75
      %p84 = scmp.eq.s32.totalorder %s41, 1
      %p85 = por %p83, %p84
      %p86 = scmp.ne.s32.totalorder %s75, %s76
      %p87 = scmp.eq.s32.totalorder %s41, 0
      %p88 = por %p86, %p87
      %p89 = scmp.ne.s32.totalorder %s75, %s76
      %p90 = scmp.eq.s32.totalorder %s42, 1
      %p91 = por %p89, %p90
      %p93 = scmp.ne.s32.totalorder %s76, %s92
      %p94 = scmp.eq.s32.totalorder %s42, 0
      %p95 = por %p93, %p94
      %s97 = sadd.s32 %s96, 1
      %p100 = scmp.eq.s32.totalorder %s36, 1
      %p101 = scmp.ne.s32.totalorder %s96, %s98
      %p102 = scmp.eq.s32.totalorder %s36, 0
      %p103 = por %p101, %p102
      %p104 = scmp.ne.s32.totalorder %s96, %s98
      %p105 = scmp.eq.s32.totalorder %s41, 1
      %p106 = por %p104, %p105
      %p107 = scmp.ne.s32.totalorder %s98, %s99
      %p108 = scmp.eq.s32.totalorder %s41, 0
      %p109 = por %p107, %p108
      %p110 = scmp.ne.s32.totalorder %s98, %s99
      %p111 = scmp.eq.s32.totalorder %s42, 1
      %p112 = por %p110, %p111
      %p114 = scmp.ne.s32.totalorder %s99, %s113
      %p115 = scmp.eq.s32.totalorder %s42, 0
      %p116 = por %p114, %p115
      %s118 = sadd.s32 %s117, 1
      %p121 = scmp.eq.s32.totalorder %s36, 1
      %p122 = scmp.ne.s32.totalorder %s117, %s119
      %p123 = scmp.eq.s32.totalorder %s36, 0
      %p124 = por %p122, %p123
      %p125 = scmp.ne.s32.totalorder %s117, %s119
      %p126 = scmp.eq.s32.totalorder %s41, 1
      %p127 = por %p125, %p126
      %p128 = scmp.ne.s32.totalorder %s119, %s120
      %p129 = scmp.eq.s32.totalorder %s41, 0
      %p130 = por %p128, %p129
      %p131 = scmp.ne.s32.totalorder %s119, %s120
      %p132 = scmp.eq.s32.totalorder %s42, 1
      %p133 = por %p131, %p132
      %p135 = scmp.ne.s32.totalorder %s120, %s134
      %p136 = scmp.eq.s32.totalorder %s42, 0
      %p137 = por %p135, %p136
      %s139 = sadd.s32 %s138, 1
      %p142 = scmp.eq.s32.totalorder %s36, 1
      %p143 = scmp.ne.s32.totalorder %s138, %s140
      %p144 = scmp.eq.s32.totalorder %s36, 0
      %p145 = por %p143, %p144
      %p146 = scmp.ne.s32.totalorder %s138, %s140
      %p147 = scmp.eq.s32.totalorder %s41, 1
      %p148 = por %p146, %p147
      %p149 = scmp.ne.s32.totalorder %s140, %s141
      %p150 = scmp.eq.s32.totalorder %s41, 0
      %p151 = por %p149, %p150
      %p152 = scmp.ne.s32.totalorder %s140, %s141
      %p153 = scmp.eq.s32.totalorder %s42, 1
      %p154 = por %p152, %p153
      %p156 = scmp.ne.s32.totalorder %s141, %s155
      %p157 = scmp.eq.s32.totalorder %s42, 0
      %p158 = por %p156, %p157
      %s160 = sadd.s32 %s159, 1
      %p163 = scmp.eq.s32.totalorder %s36, 1
      %p164 = scmp.ne.s32.totalorder %s159, %s161
      %p165 = scmp.eq.s32.totalorder %s36, 0
      %p166 = por %p164, %p165
      %p167 = scmp.ne.s32.totalorder %s159, %s161
      %p168 = scmp.eq.s32.totalorder %s41, 1
      %p169 = por %p167, %p168
      %p170 = scmp.ne.s32.totalorder %s161, %s162
      %p171 = scmp.eq.s32.totalorder %s41, 0
      %p172 = por %p170, %p171
      %p173 = scmp.ne.s32.totalorder %s161, %s162
      %p174 = scmp.eq.s32.totalorder %s42, 1
      %p175 = por %p173, %p174
      %p177 = scmp.ne.s32.totalorder %s162, %s176
      %p178 = scmp.eq.s32.totalorder %s42, 0
      %p179 = por %p177, %p178
      %s181 = sadd.s32 %s180, 1
      %p184 = scmp.eq.s32.totalorder %s36, 1
      %p185 = scmp.ne.s32.totalorder %s180, %s182
      %p186 = scmp.eq.s32.totalorder %s36, 0
      %p187 = por %p185, %p186
      %p188 = scmp.ne.s32.totalorder %s180, %s182
      %p189 = scmp.eq.s32.totalorder %s41, 1
      %p190 = por %p188, %p189
      %p191 = scmp.ne.s32.totalorder %s182, %s183
      %p192 = scmp.eq.s32.totalorder %s41, 0
      %p193 = por %p191, %p192
      %p194 = scmp.ne.s32.totalorder %s182, %s183
      %p195 = scmp.eq.s32.totalorder %s42, 1
      %p196 = por %p194, %p195
      %p198 = scmp.ne.s32.totalorder %s183, %s197
      %p199 = scmp.eq.s32.totalorder %s42, 0
      %p200 = por %p198, %p199
      %s202 = sadd.s32 %s201, 1
      %p205 = scmp.eq.s32.totalorder %s36, 1
      %p206 = scmp.ne.s32.totalorder %s201, %s203
      %p207 = scmp.eq.s32.totalorder %s36, 0
      %p208 = por %p206, %p207
      %p209 = scmp.ne.s32.totalorder %s201, %s203
      %p210 = scmp.eq.s32.totalorder %s41, 1
      %p211 = por %p209, %p210
      %p212 = scmp.ne.s32.totalorder %s203, %s204
      %p213 = scmp.eq.s32.totalorder %s41, 0
      %p214 = por %p212, %p213
      %p215 = scmp.ne.s32.totalorder %s203, %s204
      %p216 = scmp.eq.s32.totalorder %s42, 1
      %p217 = por %p215, %p216
      %p219 = scmp.ne.s32.totalorder %s204, %s218
      %p220 = scmp.eq.s32.totalorder %s42, 0
      %p221 = por %p219, %p220
      %s223 = sadd.s32 %s222, 1
      %p226 = scmp.eq.s32.totalorder %s36, 1
      %p227 = scmp.ne.s32.totalorder %s222, %s224
      %p228 = scmp.eq.s32.totalorder %s36, 0
      %p229 = por %p227, %p228
      %p230 = scmp.ne.s32.totalorder %s222, %s224
      %p231 = scmp.eq.s32.totalorder %s41, 1
      %p232 = por %p230, %p231
      %p233 = scmp.ne.s32.totalorder %s224, %s225
      %p234 = scmp.eq.s32.totalorder %s41, 0
      %p235 = por %p233, %p234
      %p236 = scmp.ne.s32.totalorder %s224, %s225
      %p237 = scmp.eq.s32.totalorder %s42, 1
      %p238 = por %p236, %p237
      %p240 = scmp.ne.s32.totalorder %s225, %s239
      %p241 = scmp.eq.s32.totalorder %s42, 0
      %p242 = por %p240, %p241
      %s244 = sadd.s32 %s243, 1
      %p247 = scmp.eq.s32.totalorder %s36, 1
      %p248 = scmp.ne.s32.totalorder %s243, %s245
      %p249 = scmp.eq.s32.totalorder %s36, 0
      %p250 = por %p248, %p249
      %p251 = scmp.ne.s32.totalorder %s243, %s245
      %p252 = scmp.eq.s32.totalorder %s41, 1
      %p253 = por %p251, %p252
      %p254 = scmp.ne.s32.totalorder %s245, %s246
      %p255 = scmp.eq.s32.totalorder %s41, 0
      %p256 = por %p254, %p255
      %p257 = scmp.ne.s32.totalorder %s245, %s246
      %p258 = scmp.eq.s32.totalorder %s42, 1
      %p259 = por %p257, %p258
      %p261 = scmp.ne.s32.totalorder %s246, %s260
      %p262 = scmp.eq.s32.totalorder %s42, 0
      %p263 = por %p261, %p262
      %s265 = sadd.s32 %s264, 1
      %p268 = scmp.eq.s32.totalorder %s36, 1
      %p269 = scmp.ne.s32.totalorder %s264, %s266
      %p270 = scmp.eq.s32.totalorder %s36, 0
      %p271 = por %p269, %p270
      %p272 = scmp.ne.s32.totalorder %s264, %s266
      %p273 = scmp.eq.s32.totalorder %s41, 1
      %p274 = por %p272, %p273
      %p275 = scmp.ne.s32.totalorder %s266, %s267
      %p276 = scmp.eq.s32.totalorder %s41, 0
      %p277 = por %p275, %p276
      %p278 = scmp.ne.s32.totalorder %s266, %s267
      %p279 = scmp.eq.s32.totalorder %s42, 1
      %p280 = por %p278, %p279
      %p282 = scmp.ne.s32.totalorder %s267, %s281
      %p283 = scmp.eq.s32.totalorder %s42, 0
      %p284 = por %p282, %p283
      %s286 = sadd.s32 %s285, 1
      %p289 = scmp.eq.s32.totalorder %s36, 1
      %p290 = scmp.ne.s32.totalorder %s285, %s287
      %p291 = scmp.eq.s32.totalorder %s36, 0
      %p292 = por %p290, %p291
      %p293 = scmp.ne.s32.totalorder %s285, %s287
      %p294 = scmp.eq.s32.totalorder %s41, 1
      %p295 = por %p293, %p294
      %p296 = scmp.ne.s32.totalorder %s287, %s288
      %p297 = scmp.eq.s32.totalorder %s41, 0
      %p298 = por %p296, %p297
      %p299 = scmp.ne.s32.totalorder %s287, %s288
      %p300 = scmp.eq.s32.totalorder %s42, 1
      %p301 = por %p299, %p300
      %p303 = scmp.ne.s32.totalorder %s288, %s302
      %p304 = scmp.eq.s32.totalorder %s42, 0
      %p305 = por %p303, %p304
      %s307 = sadd.s32 %s306, 1
      %p310 = scmp.eq.s32.totalorder %s36, 1
      %p311 = scmp.ne.s32.totalorder %s306, %s308
      %p312 = scmp.eq.s32.totalorder %s36, 0
      %p313 = por %p311, %p312
      %p314 = scmp.ne.s32.totalorder %s306, %s308
      %p315 = scmp.eq.s32.totalorder %s41, 1
      %p316 = por %p314, %p315
      %p317 = scmp.ne.s32.totalorder %s308, %s309
      %p318 = scmp.eq.s32.totalorder %s41, 0
      %p319 = por %p317, %p318
      %p320 = scmp.ne.s32.totalorder %s308, %s309
      %p321 = scmp.eq.s32.totalorder %s42, 1
      %p322 = por %p320, %p321
      %p324 = scmp.ne.s32.totalorder %s309, %s323
      %p325 = scmp.eq.s32.totalorder %s42, 0
      %p326 = por %p324, %p325
      %s328 = sadd.s32 %s327, 1
      %p331 = scmp.eq.s32.totalorder %s36, 1
      %p332 = scmp.ne.s32.totalorder %s327, %s329
      %p333 = scmp.eq.s32.totalorder %s36, 0
      %p334 = por %p332, %p333
      %p335 = scmp.ne.s32.totalorder %s327, %s329
      %p336 = scmp.eq.s32.totalorder %s41, 1
      %p337 = por %p335, %p336
      %p338 = scmp.ne.s32.totalorder %s329, %s330
      %p339 = scmp.eq.s32.totalorder %s41, 0
      %p340 = por %p338, %p339
      %p341 = scmp.ne.s32.totalorder %s329, %s330
      %p342 = scmp.eq.s32.totalorder %s42, 1
      %p343 = por %p341, %p342
      %p345 = scmp.ne.s32.totalorder %s330, %s344
      %p346 = scmp.eq.s32.totalorder %s42, 0
      %p347 = por %p345, %p346
      %s349 = sadd.s32 %s348, 1
      %p352 = scmp.eq.s32.totalorder %s36, 1
      %p353 = scmp.ne.s32.totalorder %s348, %s350
      %p354 = scmp.eq.s32.totalorder %s36, 0
      %p355 = por %p353, %p354
      %p356 = scmp.ne.s32.totalorder %s348, %s350
      %p357 = scmp.eq.s32.totalorder %s41, 1
      %p358 = por %p356, %p357
      %p359 = scmp.ne.s32.totalorder %s350, %s351
      %p360 = scmp.eq.s32.totalorder %s41, 0
      %p361 = por %p359, %p360
      %p362 = scmp.ne.s32.totalorder %s350, %s351
      %p363 = scmp.eq.s32.totalorder %s42, 1
      %p364 = por %p362, %p363
      %p366 = scmp.ne.s32.totalorder %s351, %s365
      %p367 = scmp.eq.s32.totalorder %s42, 0
      %p368 = por %p366, %p367
      %s370 = sadd.s32 %s369, 1
      %p373 = scmp.eq.s32.totalorder %s36, 1
      %p374 = scmp.ne.s32.totalorder %s369, %s371
      %p375 = scmp.eq.s32.totalorder %s36, 0
      %p376 = por %p374, %p375
      %p377 = scmp.ne.s32.totalorder %s369, %s371
      %p378 = scmp.eq.s32.totalorder %s41, 1
      %p379 = por %p377, %p378
      %p380 = scmp.ne.s32.totalorder %s371, %s372
      %p381 = scmp.eq.s32.totalorder %s41, 0
      %p382 = por %p380, %p381
      %p383 = scmp.ne.s32.totalorder %s371, %s372
      %p384 = scmp.eq.s32.totalorder %s42, 1
      %p385 = por %p383, %p384
      %p387 = scmp.ne.s32.totalorder %s372, %s386
      %p388 = scmp.eq.s32.totalorder %s42, 0
      %p389 = por %p387, %p388
      %s391 = sadd.s32 %s390, 1
      %p394 = scmp.eq.s32.totalorder %s36, 1
      %p395 = scmp.ne.s32.totalorder %s390, %s392
      %p396 = scmp.eq.s32.totalorder %s36, 0
      %p397 = por %p395, %p396
      %p398 = scmp.ne.s32.totalorder %s390, %s392
      %p399 = scmp.eq.s32.totalorder %s41, 1
      %p400 = por %p398, %p399
      %p401 = scmp.ne.s32.totalorder %s392, %s393
      %p402 = scmp.eq.s32.totalorder %s41, 0
      %p403 = por %p401, %p402
      %p404 = scmp.ne.s32.totalorder %s392, %s393
      %p405 = scmp.eq.s32.totalorder %s42, 1
      %p406 = por %p404, %p405
      %p408 = scmp.ne.s32.totalorder %s393, %s407
      %p409 = scmp.eq.s32.totalorder %s42, 0
      %p410 = por %p408, %p409
      %s412 = sadd.s32 %s411, 1
      %p415 = scmp.eq.s32.totalorder %s36, 1
      %p416 = scmp.ne.s32.totalorder %s411, %s413
      %p417 = scmp.eq.s32.totalorder %s36, 0
      %p418 = por %p416, %p417
      %p419 = scmp.ne.s32.totalorder %s411, %s413
      %p420 = scmp.eq.s32.totalorder %s41, 1
      %p421 = por %p419, %p420
      %p422 = scmp.ne.s32.totalorder %s413, %s414
      %p423 = scmp.eq.s32.totalorder %s41, 0
      %p424 = por %p422, %p423
      %p425 = scmp.ne.s32.totalorder %s413, %s414
      %p426 = scmp.eq.s32.totalorder %s42, 1
      %p427 = por %p425, %p426
      %p429 = scmp.ne.s32.totalorder %s414, %s428
      %p430 = scmp.eq.s32.totalorder %s42, 0
      %p431 = por %p429, %p430
      %s433 = sadd.s32 %s432, 1
      %p436 = scmp.eq.s32.totalorder %s36, 1
      %p437 = scmp.ne.s32.totalorder %s432, %s434
      %p438 = scmp.eq.s32.totalorder %s36, 0
      %p439 = por %p437, %p438
      %p440 = scmp.ne.s32.totalorder %s432, %s434
      %p441 = scmp.eq.s32.totalorder %s41, 1
      %p442 = por %p440, %p441
      %p443 = scmp.ne.s32.totalorder %s434, %s435
      %p444 = scmp.eq.s32.totalorder %s41, 0
      %p445 = por %p443, %p444
      %p446 = scmp.ne.s32.totalorder %s434, %s435
      %p447 = scmp.eq.s32.totalorder %s42, 1
      %p448 = por %p446, %p447
      %p450 = scmp.ne.s32.totalorder %s435, %s449
      %p451 = scmp.eq.s32.totalorder %s42, 0
      %p452 = por %p450, %p451
      %s454 = sadd.s32 %s453, 1
      %p457 = scmp.eq.s32.totalorder %s36, 1
      %p458 = scmp.ne.s32.totalorder %s453, %s455
      %p459 = scmp.eq.s32.totalorder %s36, 0
      %p460 = por %p458, %p459
      %p461 = scmp.ne.s32.totalorder %s453, %s455
      %p462 = scmp.eq.s32.totalorder %s41, 1
      %p463 = por %p461, %p462
      %p464 = scmp.ne.s32.totalorder %s455, %s456
      %p465 = scmp.eq.s32.totalorder %s41, 0
      %p466 = por %p464, %p465
      %p467 = scmp.ne.s32.totalorder %s455, %s456
      %p468 = scmp.eq.s32.totalorder %s42, 1
      %p469 = por %p467, %p468
      %p471 = scmp.ne.s32.totalorder %s456, %s470
      %p472 = scmp.eq.s32.totalorder %s42, 0
      %p473 = por %p471, %p472
      %s475 = sadd.s32 %s474, 1
      %p478 = scmp.eq.s32.totalorder %s36, 1
      %p479 = scmp.ne.s32.totalorder %s474, %s476
      %p480 = scmp.eq.s32.totalorder %s36, 0
      %p481 = por %p479, %p480
      %p482 = scmp.ne.s32.totalorder %s474, %s476
      %p483 = scmp.eq.s32.totalorder %s41, 1
      %p484 = por %p482, %p483
      %p485 = scmp.ne.s32.totalorder %s476, %s477
      %p486 = scmp.eq.s32.totalorder %s41, 0
      %p487 = por %p485, %p486
      %p488 = scmp.ne.s32.totalorder %s476, %s477
      %p489 = scmp.eq.s32.totalorder %s42, 1
      %p490 = por %p488, %p489
      %p492 = scmp.ne.s32.totalorder %s477, %s491
      %p493 = scmp.eq.s32.totalorder %s42, 0
      %p494 = por %p492, %p493
      %s496 = sadd.s32 %s495, 1
      %p499 = scmp.eq.s32.totalorder %s36, 1
      %p500 = scmp.ne.s32.totalorder %s495, %s497
      %p501 = scmp.eq.s32.totalorder %s36, 0
      %p502 = por %p500, %p501
      %p503 = scmp.ne.s32.totalorder %s495, %s497
      %p504 = scmp.eq.s32.totalorder %s41, 1
      %p505 = por %p503, %p504
      %p506 = scmp.ne.s32.totalorder %s497, %s498
      %p507 = scmp.eq.s32.totalorder %s41, 0
      %p508 = por %p506, %p507
      %p509 = scmp.ne.s32.totalorder %s497, %s498
      %p510 = scmp.eq.s32.totalorder %s42, 1
      %p511 = por %p509, %p510
      %p513 = scmp.ne.s32.totalorder %s498, %s512
      %p514 = scmp.eq.s32.totalorder %s42, 0
      %p515 = por %p513, %p514
      %s516 = ssub.s32 %s36, %s43
      %p517 = scmp.eq.s32.totalorder %s516, 0
      %s519 = sadd.s32 %s518, 1
      %s520 = scalar_select %p517, %s518, %s519
      %p523 = pneg %p517
      %p524 = scmp.eq.s32.totalorder %s36, 1
      %p525 = por %p523, %p524
      %p526 = scmp.ne.s32.totalorder %s518, %s521
      %p527 = scmp.eq.s32.totalorder %s36, 0
      %p528 = por %p526, %p527
      %p529 = scmp.ne.s32.totalorder %s518, %s521
      %p530 = scmp.eq.s32.totalorder %s41, 1
      %p531 = por %p529, %p530
      %p532 = scmp.ne.s32.totalorder %s521, %s522
      %p533 = scmp.eq.s32.totalorder %s41, 0
      %p534 = por %p532, %p533
      %p535 = scmp.ne.s32.totalorder %s521, %s522
      %p536 = scmp.eq.s32.totalorder %s42, 1
      %p537 = por %p535, %p536
      %p539 = scmp.ne.s32.totalorder %s522, %s538
      %p540 = scmp.eq.s32.totalorder %s42, 0
      %p541 = por %p539, %p540
      %p542 = scmp.le.s32.totalorder 1, %s36
      %p543 = scmp.lt.s32.totalorder %s36, 3
      %p544 = pnand %p542, %p543
      %p545 = pneg %p544
      // Predicated region
      $region9: #{tpu_custom_call.1} parent=5 // pred_check
        _
      $region10: #{tpu_custom_call.1} parent=5 // pred_check_branch
        %547 = sbr.rel (%p544) target = $region12
      $region11: #{tpu_custom_call.1} parent=5 // pred_region
        %s548 = ssub.s32 %s36, 1
        // Predicated region
        $region13: #{tpu_custom_call.1} parent=11 // pred_check
          %p549 = pneg %p109
        $region14: #{tpu_custom_call.1} parent=11 // pred_check_branch
          %551 = sbr.rel (%p549) target = $region16
        $region15: #{tpu_custom_call.1} parent=11 // pred_region
          _
        $region16: #{tpu_custom_call.1} parent=11 // pred_fallthru
          _
        // Predicated region
        $region17: #{tpu_custom_call.1} parent=11 // pred_check
          %p552 = pneg %p130
        $region18: #{tpu_custom_call.1} parent=11 // pred_check_branch
          %554 = sbr.rel (%p552) target = $region20
        $region19: #{tpu_custom_call.1} parent=11 // pred_region
          _
        $region20: #{tpu_custom_call.1} parent=11 // pred_fallthru
          _
        // Predicated region
        $region21: #{tpu_custom_call.1} parent=11 // pred_check
          %p555 = pneg %p151
        $region22: #{tpu_custom_call.1} parent=11 // pred_check_branch
          %557 = sbr.rel (%p555) target = $region24
        $region23: #{tpu_custom_call.1} parent=11 // pred_region
          _
        $region24: #{tpu_custom_call.1} parent=11 // pred_fallthru
          _
        // Predicated region
        $region25: #{tpu_custom_call.1} parent=11 // pred_check
          %p558 = pneg %p172
        $region26: #{tpu_custom_call.1} parent=11 // pred_check_branch
          %560 = sbr.rel (%p558) target = $region28
        $region27: #{tpu_custom_call.1} parent=11 // pred_region
          _
        $region28: #{tpu_custom_call.1} parent=11 // pred_fallthru
          _
        // Predicated region
        $region29: #{tpu_custom_call.1} parent=11 // pred_check
          %p561 = pneg %p193
        $region30: #{tpu_custom_call.1} parent=11 // pred_check_branch
          %563 = sbr.rel (%p561) target = $region32
        $region31: #{tpu_custom_call.1} parent=11 // pred_region
          %565 = vsyncadd [#allocation6], 0
          %s566 = sshll.u32 %s6, 4
          %s567 = int_to_ptr.hbm [resolvable:$true] %s566
          %s568 = sshll.u32 [#allocation5], 4
          %s569 = int_to_ptr.vmem [resolvable:$true] %s568
          %574 = dma.hbm_to_vmem [thread:$0]  %s567, 512, %s569, [#allocation6], 128, 128, 8
        $region32: #{tpu_custom_call.1} parent=11 // pred_fallthru
          _
        // Predicated region
        $region33: #{tpu_custom_call.1} parent=11 // pred_check
          %p575 = pneg %p214
        $region34: #{tpu_custom_call.1} parent=11 // pred_check_branch
          %577 = sbr.rel (%p575) target = $region36
        $region35: #{tpu_custom_call.1} parent=11 // pred_region
          _
        $region36: #{tpu_custom_call.1} parent=11 // pred_fallthru
          _
        // Predicated region
        $region37: #{tpu_custom_call.1} parent=11 // pred_check
          %p578 = pneg %p235
        $region38: #{tpu_custom_call.1} parent=11 // pred_check_branch
          %580 = sbr.rel (%p578) target = $region40
        $region39: #{tpu_custom_call.1} parent=11 // pred_region
          %582 = vsyncadd [#allocation6], 0
          %s583 = sshll.u32 %s8, 4
          %s584 = int_to_ptr.hbm [resolvable:$true] %s583
          %s585 = sshll.u32 [#allocation7], 4
          %s586 = int_to_ptr.vmem [resolvable:$true] %s585
          %591 = dma.hbm_to_vmem [thread:$0]  %s584, 512, %s586, [#allocation6], 128, 128, 8
        $region40: #{tpu_custom_call.1} parent=11 // pred_fallthru
          _
        // Predicated region
        $region41: #{tpu_custom_call.1} parent=11 // pred_check
          %p592 = pneg %p256
        $region42: #{tpu_custom_call.1} parent=11 // pred_check_branch
          %594 = sbr.rel (%p592) target = $region44
        $region43: #{tpu_custom_call.1} parent=11 // pred_region
          _
        $region44: #{tpu_custom_call.1} parent=11 // pred_fallthru
          _
        // Predicated region
        $region45: #{tpu_custom_call.1} parent=11 // pred_check
          %p595 = pneg %p277
        $region46: #{tpu_custom_call.1} parent=11 // pred_check_branch
          %597 = sbr.rel (%p595) target = $region48
        $region47: #{tpu_custom_call.1} parent=11 // pred_region
          %599 = vsyncadd [#allocation9], 0
          %s600 = sshll.u32 %s10, 4
          %s601 = int_to_ptr.hbm [resolvable:$true] %s600
          %s602 = sshll.u32 [#allocation8], 4
          %s603 = int_to_ptr.vmem [resolvable:$true] %s602
          %608 = dma.hbm_to_vmem [thread:$0]  %s601, 512, %s603, [#allocation9], 128, 128, 8
        $region48: #{tpu_custom_call.1} parent=11 // pred_fallthru
          _
        // Predicated region
        $region49: #{tpu_custom_call.1} parent=11 // pred_check
          %p609 = pneg %p298
        $region50: #{tpu_custom_call.1} parent=11 // pred_check_branch
          %611 = sbr.rel (%p609) target = $region52
        $region51: #{tpu_custom_call.1} parent=11 // pred_region
          _
        $region52: #{tpu_custom_call.1} parent=11 // pred_fallthru
          _
        // Predicated region
        $region53: #{tpu_custom_call.1} parent=11 // pred_check
          %p612 = pneg %p319
        $region54: #{tpu_custom_call.1} parent=11 // pred_check_branch
          %614 = sbr.rel (%p612) target = $region56
        $region55: #{tpu_custom_call.1} parent=11 // pred_region
          %616 = vsyncadd [#allocation9], 0
          %s617 = sshll.u32 %s12, 4
          %s618 = int_to_ptr.hbm [resolvable:$true] %s617
          %s619 = sshll.u32 [#allocation10], 4
          %s620 = int_to_ptr.vmem [resolvable:$true] %s619
          %625 = dma.hbm_to_vmem [thread:$0]  %s618, 512, %s620, [#allocation9], 128, 128, 8
        $region56: #{tpu_custom_call.1} parent=11 // pred_fallthru
          _
        // Predicated region
        $region57: #{tpu_custom_call.1} parent=11 // pred_check
          %p626 = pneg %p340
        $region58: #{tpu_custom_call.1} parent=11 // pred_check_branch
          %628 = sbr.rel (%p626) target = $region60
        $region59: #{tpu_custom_call.1} parent=11 // pred_region
          _
        $region60: #{tpu_custom_call.1} parent=11 // pred_fallthru
          _
        // Predicated region
        $region61: #{tpu_custom_call.1} parent=11 // pred_check
          %p629 = pneg %p361
        $region62: #{tpu_custom_call.1} parent=11 // pred_check_branch
          %631 = sbr.rel (%p629) target = $region64
        $region63: #{tpu_custom_call.1} parent=11 // pred_region
          _
        $region64: #{tpu_custom_call.1} parent=11 // pred_fallthru
          _
        // Predicated region
        $region65: #{tpu_custom_call.1} parent=11 // pred_check
          %p632 = pneg %p382
        $region66: #{tpu_custom_call.1} parent=11 // pred_check_branch
          %634 = sbr.rel (%p632) target = $region68
        $region67: #{tpu_custom_call.1} parent=11 // pred_region
          _
        $region68: #{tpu_custom_call.1} parent=11 // pred_fallthru
          _
        // Predicated region
        $region69: #{tpu_custom_call.1} parent=11 // pred_check
          %p635 = pneg %p403
        $region70: #{tpu_custom_call.1} parent=11 // pred_check_branch
          %637 = sbr.rel (%p635) target = $region72
        $region71: #{tpu_custom_call.1} parent=11 // pred_region
          _
        $region72: #{tpu_custom_call.1} parent=11 // pred_fallthru
          _
        // Predicated region
        $region73: #{tpu_custom_call.1} parent=11 // pred_check
          %p638 = pneg %p424
        $region74: #{tpu_custom_call.1} parent=11 // pred_check_branch
          %640 = sbr.rel (%p638) target = $region76
        $region75: #{tpu_custom_call.1} parent=11 // pred_region
          _
        $region76: #{tpu_custom_call.1} parent=11 // pred_fallthru
          _
        // Predicated region
        $region77: #{tpu_custom_call.1} parent=11 // pred_check
          %p641 = pneg %p445
        $region78: #{tpu_custom_call.1} parent=11 // pred_check_branch
          %643 = sbr.rel (%p641) target = $region80
        $region79: #{tpu_custom_call.1} parent=11 // pred_region
          _
        $region80: #{tpu_custom_call.1} parent=11 // pred_fallthru
          _
        // Predicated region
        $region81: #{tpu_custom_call.1} parent=11 // pred_check
          %p644 = pneg %p466
        $region82: #{tpu_custom_call.1} parent=11 // pred_check_branch
          %646 = sbr.rel (%p644) target = $region84
        $region83: #{tpu_custom_call.1} parent=11 // pred_region
          _
        $region84: #{tpu_custom_call.1} parent=11 // pred_fallthru
          _
        // Predicated region
        $region85: #{tpu_custom_call.1} parent=11 // pred_check
          %p647 = pneg %p487
        $region86: #{tpu_custom_call.1} parent=11 // pred_check_branch
          %649 = sbr.rel (%p647) target = $region88
        $region87: #{tpu_custom_call.1} parent=11 // pred_region
          _
        $region88: #{tpu_custom_call.1} parent=11 // pred_fallthru
          _
        // Predicated region
        $region89: #{tpu_custom_call.1} parent=11 // pred_check
          %p650 = pneg %p508
        $region90: #{tpu_custom_call.1} parent=11 // pred_check_branch
          %652 = sbr.rel (%p650) target = $region92
        $region91: #{tpu_custom_call.1} parent=11 // pred_region
          _
        $region92: #{tpu_custom_call.1} parent=11 // pred_fallthru
          _
      $region12: #{tpu_custom_call.1} parent=5 // pred_fallthru
        _
      %p653 = scmp.lt.s32.totalorder %s36, 2
      // Predicated region
      $region93: #{tpu_custom_call.1} parent=5 // pred_check
        %p654 = pneg %p653
      $region94: #{tpu_custom_call.1} parent=5 // pred_check_branch
        %656 = sbr.rel (%p654) target = $region96
      $region95: #{tpu_custom_call.1} parent=5 // pred_region
        // Predicated region
        $region97: #{tpu_custom_call.1} parent=95 // pred_check
          %p657 = pneg %p56
        $region98: #{tpu_custom_call.1} parent=95 // pred_check_branch
          %659 = sbr.rel (%p657) target = $region100
        $region99: #{tpu_custom_call.1} parent=95 // pred_region
          %s660 = sand.u32 %s46, 1
          %s661 = scalar_lea.sflag [#allocation3], %s660
          %s662 = sand.u32 %s46, 1
          %s663 = smul.addr %s662, 8
          %s664 = scalar_lea.vmem [#allocation2], %s663
          %666 = vsyncadd %s661, 0
          %s667 = smul.addr %s36, 8
          %s668 = scalar_lea.hbm %s0, %s667
          %s670 = sshll.u32 %s668, 4
          %s671 = int_to_ptr.hbm [resolvable:$true] %s670
          %s672 = sshll.u32 %s664, 4
          %s673 = int_to_ptr.vmem [resolvable:$true] %s672
          %675 = dma.hbm_to_vmem [thread:$0]  %s671, 128, %s673, %s661
        $region100: #{tpu_custom_call.1} parent=95 // pred_fallthru
          _
        // Predicated region
        $region101: #{tpu_custom_call.1} parent=95 // pred_check
          %p676 = pneg %p82
        $region102: #{tpu_custom_call.1} parent=95 // pred_check_branch
          %678 = sbr.rel (%p676) target = $region104
        $region103: #{tpu_custom_call.1} parent=95 // pred_region
          %p679 = scmp.lt.s32.totalorder %s36, 1
          %s680 = scalar_select %p679, %s36, 1
          %s681 = smul.addr %s680, 2
          %s682 = smul.addr %s681, 8
          %s683 = scalar_lea.vmem %s1, %s682
        $region104: #{tpu_custom_call.1} parent=95 // pred_fallthru
          _
      $region96: #{tpu_custom_call.1} parent=5 // pred_fallthru
        _
      %p684 = scmp.le.s32.totalorder 1, %s36
      %p685 = scmp.lt.s32.totalorder %s36, 3
      %p686 = pnand %p684, %p685
      %p687 = pneg %p686
      // Predicated region
      $region105: #{tpu_custom_call.1} parent=5 // pred_check
        _
      $region106: #{tpu_custom_call.1} parent=5 // pred_check_branch
        %689 = sbr.rel (%p686) target = $region108
      $region107: #{tpu_custom_call.1} parent=5 // pred_region
        %s690 = ssub.s32 %s36, 1
        %s691 = sand.u32 %s49, 1
        %s692 = scalar_lea.sflag [#allocation3], %s691
        %s693 = sand.u32 %s49, 1
        %s694 = smul.addr %s693, 8
        %s695 = scalar_lea.vmem [#allocation2], %s694
        // Predicated region
        $region109: #{tpu_custom_call.1} parent=107 // pred_check
          %p696 = pneg %p62
        $region110: #{tpu_custom_call.1} parent=107 // pred_check_branch
          %698 = sbr.rel (%p696) target = $region112
        $region111: #{tpu_custom_call.1} parent=107 // pred_region
          %700 = dma.done %s692, 128
        $region112: #{tpu_custom_call.1} parent=107 // pred_fallthru
          _
        // Predicated region
        $region113: #{tpu_custom_call.1} parent=107 // pred_check
          %p701 = pneg %p193
        $region114: #{tpu_custom_call.1} parent=107 // pred_check_branch
          %703 = sbr.rel (%p701) target = $region116
        $region115: #{tpu_custom_call.1} parent=107 // pred_region
          %705 = dma.done [#allocation6], 512
        $region116: #{tpu_custom_call.1} parent=107 // pred_fallthru
          _
        // Predicated region
        $region117: #{tpu_custom_call.1} parent=107 // pred_check
          %p706 = pneg %p235
        $region118: #{tpu_custom_call.1} parent=107 // pred_check_branch
          %708 = sbr.rel (%p706) target = $region120
        $region119: #{tpu_custom_call.1} parent=107 // pred_region
          %710 = dma.done [#allocation6], 512
        $region120: #{tpu_custom_call.1} parent=107 // pred_fallthru
          _
        // Predicated region
        $region121: #{tpu_custom_call.1} parent=107 // pred_check
          %p711 = pneg %p277
        $region122: #{tpu_custom_call.1} parent=107 // pred_check_branch
          %713 = sbr.rel (%p711) target = $region124
        $region123: #{tpu_custom_call.1} parent=107 // pred_region
          %715 = dma.done [#allocation9], 512
        $region124: #{tpu_custom_call.1} parent=107 // pred_fallthru
          _
        // Predicated region
        $region125: #{tpu_custom_call.1} parent=107 // pred_check
          %p716 = pneg %p319
        $region126: #{tpu_custom_call.1} parent=107 // pred_check_branch
          %718 = sbr.rel (%p716) target = $region128
        $region127: #{tpu_custom_call.1} parent=107 // pred_region
          %720 = dma.done [#allocation9], 512
        $region128: #{tpu_custom_call.1} parent=107 // pred_fallthru
          _
        %s721 = sand.u32 %s49, 1
        %s722 = scalar_lea.sflag [#allocation3], %s721
        %s723 = sand.u32 %s49, 1
        %s724 = smul.addr %s723, 8
        %s725 = scalar_lea.vmem [#allocation2], %s724
        %p726 = pneg %p62
        %p727 = pneg %p59
        %p728 = scmp.lt.s32.totalorder %s41, 1
        %s729 = scalar_select %p728, %s41, 1
        %s730 = smul.addr %s729, 2
        %s731 = smul.addr %s730, 8
        %s732 = scalar_lea.vmem %s1, %s731
        %p733 = pneg %p88
        %p734 = pneg %p85
        %p735 = pneg %p109
        %p736 = pneg %p106
        %p737 = pneg %p130
        %p738 = pneg %p127
        %p739 = pneg %p151
        %p740 = pneg %p148
        %p741 = pneg %p172
        %p742 = pneg %p169
        %p743 = pneg %p193
        %p744 = pneg %p190
        %p745 = pneg %p214
        %p746 = pneg %p211
        %p747 = pneg %p235
        %p748 = pneg %p232
        %p749 = pneg %p256
        %p750 = pneg %p253
        %p751 = pneg %p277
        %p752 = pneg %p274
        %p753 = pneg %p298
        %p754 = pneg %p295
        %p755 = pneg %p319
        %p756 = pneg %p316
        %p757 = pneg %p340
        %p758 = pneg %p337
        %p759 = pneg %p361
        %p760 = pneg %p358
        %p761 = pneg %p382
        %p762 = pneg %p379
        %p763 = pneg %p403
        %p764 = pneg %p400
        %p765 = pneg %p424
        %p766 = pneg %p421
        %p767 = pneg %p445
        %p768 = pneg %p442
        %p769 = pneg %p466
        %p770 = pneg %p463
        %p771 = pneg %p487
        %p772 = pneg %p484
        %p773 = pneg %p508
        %p774 = pneg %p505
        %p775 = pneg %p534
        %p776 = pneg %p531
        %s777 = sand.u32 %s521, 1
        %s778 = scalar_lea.sflag [#allocation4], %s777
        %s779 = sand.u32 %s521, 1
        %s780 = smul.addr %s779, 8
        %s781 = scalar_lea.vmem [#allocation11], %s780
        %p782 = scmp.lt.s32.totalorder %s41, 1
        %s783 = scalar_select %p782, %s41, 1
        %s784 = smul.addr %s783, 2
        %s785 = smul.addr %s784, 8
        %s786 = scalar_lea.vmem %s1, %s785
        %v787 = vld [vmem:[%s695] sm:$0xff]
        %v788 = vld [vmem:[%s786] sm:$0xff]
        %v789 = vld [vmem:[%s786 + $0x8] sm:$0xff]
        %v790 = vld [vmem:[%s2] sm:$0xff]
        %v791 = vld [vmem:[%s2 + $0x8] sm:$0xff]
        %v792 = vld [vmem:[%s2 + $0x10] sm:$0xff]
        %v793 = vld [vmem:[%s2 + $0x18] sm:$0xff]
        %v794 = vld [vmem:[%s3] sm:$0x1]
        %v795 = vld [vmem:[%s4] sm:$0xff]
        %v796 = vld [vmem:[%s4 + $0x8] sm:$0xff]
        %v797 = vld [vmem:[%s4 + $0x10] sm:$0xff]
        %v798 = vld [vmem:[%s4 + $0x18] sm:$0xff]
        %v799 = vld [vmem:[%s5] sm:$0x1]
        %v800 = vld [vmem:[#allocation5] sm:$0xff]
        %v801 = vld [vmem:[#allocation5 + $0x8] sm:$0xff]
        %v802 = vld [vmem:[#allocation5 + $0x10] sm:$0xff]
        %v803 = vld [vmem:[#allocation5 + $0x18] sm:$0xff]
        %v804 = vld [vmem:[%s7] sm:$0x1]
        %v805 = vld [vmem:[#allocation7] sm:$0xff]
        %v806 = vld [vmem:[#allocation7 + $0x8] sm:$0xff]
        %v807 = vld [vmem:[#allocation7 + $0x10] sm:$0xff]
        %v808 = vld [vmem:[#allocation7 + $0x18] sm:$0xff]
        %v809 = vld [vmem:[%s9] sm:$0x1]
        %v810 = vld [vmem:[#allocation8] sm:$0xff]
        %v811 = vld [vmem:[#allocation8 + $0x8] sm:$0xff]
        %v812 = vld [vmem:[#allocation8 + $0x10] sm:$0xff]
        %v813 = vld [vmem:[#allocation8 + $0x18] sm:$0xff]
        %v814 = vld [vmem:[%s11] sm:$0x1]
        %v815 = vld [vmem:[#allocation10] sm:$0xff]
        %v816 = vld [vmem:[#allocation10 + $0x8] sm:$0xff]
        %v817 = vld [vmem:[#allocation10 + $0x10] sm:$0xff]
        %v818 = vld [vmem:[#allocation10 + $0x18] sm:$0xff]
        %v819 = vld [vmem:[%s13] sm:$0x1]
        %v820 = vld [vmem:[%s14] sm:$0xff]
        %v821 = vld [vmem:[%s14 + $0x8] sm:$0xff]
        %v822 = vld [vmem:[%s14 + $0x10] sm:$0xff]
        %v823 = vld [vmem:[%s14 + $0x18] sm:$0xff]
        %v824 = vld [vmem:[%s14 + $0x20] sm:$0xff]
        %v825 = vld [vmem:[%s14 + $0x28] sm:$0xff]
        %v826 = vld [vmem:[%s14 + $0x30] sm:$0xff]
        %v827 = vld [vmem:[%s14 + $0x38] sm:$0xff]
        %v828 = vld [vmem:[%s15] sm:$0x1]
        %v829 = vld [vmem:[%s16] sm:$0x1]
        %v830 = vld [vmem:[%s17] sm:$0x1]
        %v831 = vld [vmem:[%s18] sm:$0x1]
        %v832 = vld [vmem:[%s19] sm:$0x1]
        %v833 = vld [vmem:[%s20] sm:$0x1]
        %v834 = vld [vmem:[%s21] sm:$0x1]
        %v836 = vperm.slane %v809, 0
        %vm838 = vcmask 261120
        %v840 = vsel %vm838, %v788, 0
        %v843 = vsel %vm838, %v789, 0
        %845 = vmatpush.msra.mxu0 0.0
        %846 = vmatpush.msra.mxu0 0.0
        %847 = vmatpush.msra.mxu0 0.0
        %848 = vmatpush.msra.mxu0 0.0
        %849 = vmatpush.msra.mxu0 0.0
        %850 = vmatpush.msra.mxu0 0.0
        %851 = vmatpush.msra.mxu0 0.0
        %852 = vmatpush.msra.mxu0 0.0
        %853 = vmatpush.msra.mxu0 0.0
        %854 = vmatpush.msra.mxu0 0.0
        %855 = vmatpush.msra.mxu0 0.0
        %856 = vmatpush.msra.mxu0 0.0
        %857 = vmatpush.msra.mxu0 %v808
        %858 = vmatpush.msra.mxu0 %v807
        %859 = vmatpush.msra.mxu0 %v806
        %860 = vmatpush.msra.mxu0 %v805
        %861 = vmatmul.f32.gmra.mxu0 %v840
        %v862 = vpop.f32.mrf.mxu0
        %v863 = vadd.f32 %v836, %v862
        %864 = vmatmul.f32.gmra.mxu0 %v843
        %v865 = vpop.f32.mrf.mxu0
        %v866 = vadd.f32 %v836, %v865
        %867 = vdwg.mxu0
        loop: start=0, step=1, limit=2
        $region129: #{tpu_custom_call.1} parent=107 // loop_pre_header
          _
        $region130: #{tpu_custom_call.1} parent=107 // loop_header
          %s869 = sphi 0, %s873
          %p870 = scmp.ge.s32.totalorder %s869, 2
          %v874 = vphi %v787, %v1712
        $region131: #{tpu_custom_call.1} parent=107 // loop_header_branch
          %872 = sbr.rel (%p870) target = $region135
        $region132: #{tpu_custom_call.1} parent=107 // loop_body
          %v876 = vperm.slane %v794, 0
          %v879 = vsel %vm838, %v874, 0
          %881 = vmatpush.msra.mxu0 0.0
          %882 = vmatpush.msra.mxu0 0.0
          %883 = vmatpush.msra.mxu0 0.0
          %884 = vmatpush.msra.mxu0 0.0
          %885 = vmatpush.msra.mxu0 0.0
          %886 = vmatpush.msra.mxu0 0.0
          %887 = vmatpush.msra.mxu0 0.0
          %888 = vmatpush.msra.mxu0 0.0
          %889 = vmatpush.msra.mxu0 0.0
          %890 = vmatpush.msra.mxu0 0.0
          %891 = vmatpush.msra.mxu0 0.0
          %892 = vmatpush.msra.mxu0 0.0
          %893 = vmatpush.msra.mxu0 %v793
          %894 = vmatpush.msra.mxu0 %v792
          %895 = vmatpush.msra.mxu0 %v791
          %896 = vmatpush.msra.mxu0 %v790
          %897 = vmatmul.f32.gmra.mxu0 %v879
          %v898 = vpop.f32.mrf.mxu0
          %v899 = vadd.f32 %v876, %v898
          %900 = vdwg.mxu0
          %v901 = vmul.f32 %v899, 0.35355338
          %903 = vrot.lane.b32.xlu0 %v899, 96
          %v904 = vpop.permute.xlu0 %903
          %vm905 = vcmask 64512
          %v907 = vsel %vm905, %v901, 0
          %v909 = vsel %vm905, %v904, 0
          %911 = vmatpush.xpose.msra.mxu0 0.0
          %912 = vmatpush.xpose.msra.mxu0 0.0
          %913 = vmatpush.xpose.msra.mxu0 0.0
          %914 = vmatpush.xpose.msra.mxu0 0.0
          %915 = vmatpush.xpose.msra.mxu0 0.0
          %916 = vmatpush.xpose.msra.mxu0 0.0
          %917 = vmatpush.xpose.msra.mxu0 0.0
          %918 = vmatpush.xpose.msra.mxu0 0.0
          %919 = vmatpush.xpose.msra.mxu0 0.0
          %920 = vmatpush.xpose.msra.mxu0 0.0
          %921 = vmatpush.xpose.msra.mxu0 0.0
          %922 = vmatpush.xpose.msra.mxu0 0.0
          %923 = vmatpush.xpose.msra.mxu0 0.0
          %924 = vmatpush.xpose.msra.mxu0 0.0
          %925 = vmatpush.xpose.msra.mxu0 0.0
          %926 = vmatpush.xpose.msra.mxu0 %v909
          %927 = vmatmul.f32.gmra.mxu0 %v907
          %v928 = vpop.f32.mrf.mxu0
          %v929 = vadd.f32 0.0, %v928
          %930 = vdwg.mxu0
          %v931 = vsel %vm905, %v929, -inf
          %932 = vmax.xlane.f32.xlu0 %v931
          %v933 = vpop.xlane.xlu0 %932
          %v934 = vsub.f32 %v929, %v933
          %v935 = vmul.f32 %v934, 1.442695
          %v936 = vpow.pop %v935
          %v937 = vsel %vm905, %v936, 0.0
          %938 = vadd.xlane.f32.xlu0 %v937
          %v939 = vpop.xlane.xlu0 %938
          %v940 = vrcp.pop %v939
          %v941 = vmul.f32 %v936, %v940
          %942 = vrot.lane.b32.xlu0 %v899, 64
          %v943 = vpop.permute.xlu0 %942
          %v946 = vsel %vm905, %v941, 0
          %948 = vmatpush.msra.mxu0 0.0
          %949 = vmatpush.msra.mxu0 0.0
          %950 = vmatpush.msra.mxu0 0.0
          %951 = vmatpush.msra.mxu0 0.0
          %952 = vmatpush.msra.mxu0 0.0
          %953 = vmatpush.msra.mxu0 0.0
          %954 = vmatpush.msra.mxu0 0.0
          %955 = vmatpush.msra.mxu0 0.0
          %956 = vmatpush.msra.mxu0 0.0
          %957 = vmatpush.msra.mxu0 0.0
          %958 = vmatpush.msra.mxu0 0.0
          %959 = vmatpush.msra.mxu0 0.0
          %960 = vmatpush.msra.mxu0 0.0
          %961 = vmatpush.msra.mxu0 0.0
          %962 = vmatpush.msra.mxu0 0.0
          %963 = vmatpush.msra.mxu0 %v943
          %964 = vmatmul.f32.gmra.mxu0 %v946
          %v965 = vpop.f32.mrf.mxu0
          %v966 = vadd.f32 0.0, %v965
          %967 = vdwg.mxu0
          %968 = vrot.lane.b32.xlu0 %v901, 120
          %v969 = vpop.permute.xlu0 %968
          %970 = vrot.lane.b32.xlu0 %v899, 88
          %v971 = vpop.permute.xlu0 %970
          %v972 = vsel %vm905, %v969, 0
          %v974 = vsel %vm905, %v971, 0
          %976 = vmatpush.xpose.msra.mxu0 0.0
          %977 = vmatpush.xpose.msra.mxu0 0.0
          %978 = vmatpush.xpose.msra.mxu0 0.0
          %979 = vmatpush.xpose.msra.mxu0 0.0
          %980 = vmatpush.xpose.msra.mxu0 0.0
          %981 = vmatpush.xpose.msra.mxu0 0.0
          %982 = vmatpush.xpose.msra.mxu0 0.0
          %983 = vmatpush.xpose.msra.mxu0 0.0
          %984 = vmatpush.xpose.msra.mxu0 0.0
          %985 = vmatpush.xpose.msra.mxu0 0.0
          %986 = vmatpush.xpose.msra.mxu0 0.0
          %987 = vmatpush.xpose.msra.mxu0 0.0
          %988 = vmatpush.xpose.msra.mxu0 0.0
          %989 = vmatpush.xpose.msra.mxu0 0.0
          %990 = vmatpush.xpose.msra.mxu0 0.0
          %991 = vmatpush.xpose.msra.mxu0 %v974
          %992 = vmatmul.f32.gmra.mxu0 %v972
          %v993 = vpop.f32.mrf.mxu0
          %v994 = vadd.f32 0.0, %v993
          %995 = vdwg.mxu0
          %v996 = vsel %vm905, %v994, -inf
          %997 = vmax.xlane.f32.xlu0 %v996
          %v998 = vpop.xlane.xlu0 %997
          %v999 = vsub.f32 %v994, %v998
          %v1000 = vmul.f32 %v999, 1.442695
          %v1001 = vpow.pop %v1000
          %v1002 = vsel %vm905, %v1001, 0.0
          %1003 = vadd.xlane.f32.xlu0 %v1002
          %v1004 = vpop.xlane.xlu0 %1003
          %v1005 = vrcp.pop %v1004
          %v1006 = vmul.f32 %v1001, %v1005
          %1007 = vrot.lane.b32.xlu0 %v899, 56
          %v1008 = vpop.permute.xlu0 %1007
          %v1011 = vsel %vm905, %v1006, 0
          %1013 = vmatpush.msra.mxu0 0.0
          %1014 = vmatpush.msra.mxu0 0.0
          %1015 = vmatpush.msra.mxu0 0.0
          %1016 = vmatpush.msra.mxu0 0.0
          %1017 = vmatpush.msra.mxu0 0.0
          %1018 = vmatpush.msra.mxu0 0.0
          %1019 = vmatpush.msra.mxu0 0.0
          %1020 = vmatpush.msra.mxu0 0.0
          %1021 = vmatpush.msra.mxu0 0.0
          %1022 = vmatpush.msra.mxu0 0.0
          %1023 = vmatpush.msra.mxu0 0.0
          %1024 = vmatpush.msra.mxu0 0.0
          %1025 = vmatpush.msra.mxu0 0.0
          %1026 = vmatpush.msra.mxu0 0.0
          %1027 = vmatpush.msra.mxu0 0.0
          %1028 = vmatpush.msra.mxu0 %v1008
          %1029 = vmatmul.f32.gmra.mxu0 %v1011
          %v1030 = vpop.f32.mrf.mxu0
          %v1031 = vadd.f32 0.0, %v1030
          %1032 = vdwg.mxu0
          %1033 = vrot.lane.b32.xlu0 %v901, 112
          %v1034 = vpop.permute.xlu0 %1033
          %1035 = vrot.lane.b32.xlu0 %v899, 80
          %v1036 = vpop.permute.xlu0 %1035
          %v1037 = vsel %vm905, %v1034, 0
          %v1039 = vsel %vm905, %v1036, 0
          %1041 = vmatpush.xpose.msra.mxu0 0.0
          %1042 = vmatpush.xpose.msra.mxu0 0.0
          %1043 = vmatpush.xpose.msra.mxu0 0.0
          %1044 = vmatpush.xpose.msra.mxu0 0.0
          %1045 = vmatpush.xpose.msra.mxu0 0.0
          %1046 = vmatpush.xpose.msra.mxu0 0.0
          %1047 = vmatpush.xpose.msra.mxu0 0.0
          %1048 = vmatpush.xpose.msra.mxu0 0.0
          %1049 = vmatpush.xpose.msra.mxu0 0.0
          %1050 = vmatpush.xpose.msra.mxu0 0.0
          %1051 = vmatpush.xpose.msra.mxu0 0.0
          %1052 = vmatpush.xpose.msra.mxu0 0.0
          %1053 = vmatpush.xpose.msra.mxu0 0.0
          %1054 = vmatpush.xpose.msra.mxu0 0.0
          %1055 = vmatpush.xpose.msra.mxu0 0.0
          %1056 = vmatpush.xpose.msra.mxu0 %v1039
          %1057 = vmatmul.f32.gmra.mxu0 %v1037
          %v1058 = vpop.f32.mrf.mxu0
          %v1059 = vadd.f32 0.0, %v1058
          %1060 = vdwg.mxu0
          %v1061 = vsel %vm905, %v1059, -inf
          %1062 = vmax.xlane.f32.xlu0 %v1061
          %v1063 = vpop.xlane.xlu0 %1062
          %v1064 = vsub.f32 %v1059, %v1063
          %v1065 = vmul.f32 %v1064, 1.442695
          %v1066 = vpow.pop %v1065
          %v1067 = vsel %vm905, %v1066, 0.0
          %1068 = vadd.xlane.f32.xlu0 %v1067
          %v1069 = vpop.xlane.xlu0 %1068
          %v1070 = vrcp.pop %v1069
          %v1071 = vmul.f32 %v1066, %v1070
          %1072 = vrot.lane.b32.xlu0 %v899, 48
          %v1073 = vpop.permute.xlu0 %1072
          %v1076 = vsel %vm905, %v1071, 0
          %1078 = vmatpush.msra.mxu0 0.0
          %1079 = vmatpush.msra.mxu0 0.0
          %1080 = vmatpush.msra.mxu0 0.0
          %1081 = vmatpush.msra.mxu0 0.0
          %1082 = vmatpush.msra.mxu0 0.0
          %1083 = vmatpush.msra.mxu0 0.0
          %1084 = vmatpush.msra.mxu0 0.0
          %1085 = vmatpush.msra.mxu0 0.0
          %1086 = vmatpush.msra.mxu0 0.0
          %1087 = vmatpush.msra.mxu0 0.0
          %1088 = vmatpush.msra.mxu0 0.0
          %1089 = vmatpush.msra.mxu0 0.0
          %1090 = vmatpush.msra.mxu0 0.0
          %1091 = vmatpush.msra.mxu0 0.0
          %1092 = vmatpush.msra.mxu0 0.0
          %1093 = vmatpush.msra.mxu0 %v1073
          %1094 = vmatmul.f32.gmra.mxu0 %v1076
          %v1095 = vpop.f32.mrf.mxu0
          %v1096 = vadd.f32 0.0, %v1095
          %1097 = vdwg.mxu0
          %1098 = vrot.lane.b32.xlu0 %v901, 104
          %v1099 = vpop.permute.xlu0 %1098
          %1100 = vrot.lane.b32.xlu0 %v899, 72
          %v1101 = vpop.permute.xlu0 %1100
          %v1102 = vsel %vm905, %v1099, 0
          %v1104 = vsel %vm905, %v1101, 0
          %1106 = vmatpush.xpose.msra.mxu0 0.0
          %1107 = vmatpush.xpose.msra.mxu0 0.0
          %1108 = vmatpush.xpose.msra.mxu0 0.0
          %1109 = vmatpush.xpose.msra.mxu0 0.0
          %1110 = vmatpush.xpose.msra.mxu0 0.0
          %1111 = vmatpush.xpose.msra.mxu0 0.0
          %1112 = vmatpush.xpose.msra.mxu0 0.0
          %1113 = vmatpush.xpose.msra.mxu0 0.0
          %1114 = vmatpush.xpose.msra.mxu0 0.0
          %1115 = vmatpush.xpose.msra.mxu0 0.0
          %1116 = vmatpush.xpose.msra.mxu0 0.0
          %1117 = vmatpush.xpose.msra.mxu0 0.0
          %1118 = vmatpush.xpose.msra.mxu0 0.0
          %1119 = vmatpush.xpose.msra.mxu0 0.0
          %1120 = vmatpush.xpose.msra.mxu0 0.0
          %1121 = vmatpush.xpose.msra.mxu0 %v1104
          %1122 = vmatmul.f32.gmra.mxu0 %v1102
          %v1123 = vpop.f32.mrf.mxu0
          %v1124 = vadd.f32 0.0, %v1123
          %1125 = vdwg.mxu0
          %v1126 = vsel %vm905, %v1124, -inf
          %1127 = vmax.xlane.f32.xlu0 %v1126
          %v1128 = vpop.xlane.xlu0 %1127
          %v1129 = vsub.f32 %v1124, %v1128
          %v1130 = vmul.f32 %v1129, 1.442695
          %v1131 = vpow.pop %v1130
          %v1132 = vsel %vm905, %v1131, 0.0
          %1133 = vadd.xlane.f32.xlu0 %v1132
          %v1134 = vpop.xlane.xlu0 %1133
          %v1135 = vrcp.pop %v1134
          %v1136 = vmul.f32 %v1131, %v1135
          %1137 = vrot.lane.b32.xlu0 %v899, 40
          %v1138 = vpop.permute.xlu0 %1137
          %v1141 = vsel %vm905, %v1136, 0
          %1143 = vmatpush.msra.mxu0 0.0
          %1144 = vmatpush.msra.mxu0 0.0
          %1145 = vmatpush.msra.mxu0 0.0
          %1146 = vmatpush.msra.mxu0 0.0
          %1147 = vmatpush.msra.mxu0 0.0
          %1148 = vmatpush.msra.mxu0 0.0
          %1149 = vmatpush.msra.mxu0 0.0
          %1150 = vmatpush.msra.mxu0 0.0
          %1151 = vmatpush.msra.mxu0 0.0
          %1152 = vmatpush.msra.mxu0 0.0
          %1153 = vmatpush.msra.mxu0 0.0
          %1154 = vmatpush.msra.mxu0 0.0
          %1155 = vmatpush.msra.mxu0 0.0
          %1156 = vmatpush.msra.mxu0 0.0
          %1157 = vmatpush.msra.mxu0 0.0
          %1158 = vmatpush.msra.mxu0 %v1138
          %1159 = vmatmul.f32.gmra.mxu0 %v1141
          %v1160 = vpop.f32.mrf.mxu0
          %v1161 = vadd.f32 0.0, %v1160
          %1162 = vdwg.mxu0
          %1164 = vrot.lane.b32.xlu0 %v1031, 8
          %v1165 = vpop.permute.xlu0 %1164
          %1168 = vrot.lane.b32.xlu0 %v1096, 16
          %v1169 = vpop.permute.xlu0 %1168
          %1172 = vrot.lane.b32.xlu0 %v1161, 24
          %v1173 = vpop.permute.xlu0 %1172
          %v1175 = vsel %vm905, %v966, %v1165
          %vm1176 = vcmask 130048
          %v1177 = vsel %vm1176, %v1175, %v1169
          %vm1178 = vcmask 195584
          %v1179 = vsel %vm1178, %v1177, %v1173
          %v1181 = vperm.slane %v799, 0
          %v1184 = vsel %vm838, %v1179, 0
          %1186 = vmatpush.msra.mxu0 0.0
          %1187 = vmatpush.msra.mxu0 0.0
          %1188 = vmatpush.msra.mxu0 0.0
          %1189 = vmatpush.msra.mxu0 0.0
          %1190 = vmatpush.msra.mxu0 0.0
          %1191 = vmatpush.msra.mxu0 0.0
          %1192 = vmatpush.msra.mxu0 0.0
          %1193 = vmatpush.msra.mxu0 0.0
          %1194 = vmatpush.msra.mxu0 0.0
          %1195 = vmatpush.msra.mxu0 0.0
          %1196 = vmatpush.msra.mxu0 0.0
          %1197 = vmatpush.msra.mxu0 0.0
          %1198 = vmatpush.msra.mxu0 %v798
          %1199 = vmatpush.msra.mxu0 %v797
          %1200 = vmatpush.msra.mxu0 %v796
          %1201 = vmatpush.msra.mxu0 %v795
          %1202 = vmatmul.f32.gmra.mxu0 %v1184
          %v1203 = vpop.f32.mrf.mxu0
          %v1204 = vadd.f32 %v1181, %v1203
          %1205 = vdwg.mxu0
          %v1206 = vadd.f32 %v874, %v1204
          %v1207 = vsel %vm838, %v1206, 0.0
          %1208 = vadd.xlane.f32.xlu0 %v1207
          %v1209 = vpop.xlane.xlu0 %1208
          %v1210 = vrcp.pop 32.0
          %v1211 = vmul.f32 32.0, %v1210
          %v1212 = vsub.f32 1.0, %v1211
          %v1213 = vmul.f32 %v1210, %v1212
          %v1214 = vadd.f32 %v1210, %v1213
          %vm1215 = vweird.f32 %v1210
          %v1216 = vsel %vm1215, %v1210, %v1214
          %v1217 = vmul.f32 %v1209, %v1216
          %v1218 = vsub.f32 %v1206, %v1217
          %v1219 = vmul.f32 %v1218, %v1218
          %v1220 = vsel %vm838, %v1219, 0.0
          %1221 = vadd.xlane.f32.xlu0 %v1220
          %v1222 = vpop.xlane.xlu0 %1221
          %v1223 = vmul.f32 %v1222, %v1216
          %v1224 = vadd.f32 %v1223, 1e-05
          %v1225 = vrsqrt.pop %v1224
          %v1226 = vmul.f32 %v1225, %v1224
          %v1227 = vmul.f32 %v1226, %v1225
          %v1228 = vmul.f32 0.5, %v1227
          %v1229 = vsub.f32 1.5, %v1228
          %v1230 = vmul.f32 %v1225, %v1229
          %vm1231 = vweird.f32 %v1224
          %vm1232 = vweird.f32 %v1225
          %vm1233 = vmor %vm1231, %vm1232
          %v1234 = vsel %vm1233, %v1225, %v1230
          %v1235 = vmul.f32 %v1218, %v1234
          %v1237 = vperm.slane %v829, 0
          %v1239 = vmul.f32 %v1235, %v1237
          %v1241 = vperm.slane %v830, 0
          %v1243 = vadd.f32 %v1239, %v1241
          %v1245 = vperm.slane %v804, 0
          %v1248 = vsel %vm838, %v1243, 0
          %1250 = vmatpush.msra.mxu0 0.0
          %1251 = vmatpush.msra.mxu0 0.0
          %1252 = vmatpush.msra.mxu0 0.0
          %1253 = vmatpush.msra.mxu0 0.0
          %1254 = vmatpush.msra.mxu0 0.0
          %1255 = vmatpush.msra.mxu0 0.0
          %1256 = vmatpush.msra.mxu0 0.0
          %1257 = vmatpush.msra.mxu0 0.0
          %1258 = vmatpush.msra.mxu0 0.0
          %1259 = vmatpush.msra.mxu0 0.0
          %1260 = vmatpush.msra.mxu0 0.0
          %1261 = vmatpush.msra.mxu0 0.0
          %1262 = vmatpush.msra.mxu0 %v803
          %1263 = vmatpush.msra.mxu0 %v802
          %1264 = vmatpush.msra.mxu0 %v801
          %1265 = vmatpush.msra.mxu0 %v800
          %1266 = vmatmul.f32.gmra.mxu0 %v1248
          %v1267 = vpop.f32.mrf.mxu0
          %v1268 = vadd.f32 %v1245, %v1267
          %1269 = vdwg.mxu0
          %v1270 = vmul.f32 %v1268, 0.35355338
          %v1272 = vsel %vm905, %v1270, 0
          %v1275 = vsel %vm905, %v863, 0
          %v1278 = vsel %vm905, %v866, 0
          %1280 = vmatpush.xpose.msra.mxu0 0.0
          %1281 = vmatpush.xpose.msra.mxu0 0.0
          %1282 = vmatpush.xpose.msra.mxu0 0.0
          %1283 = vmatpush.xpose.msra.mxu0 0.0
          %1284 = vmatpush.xpose.msra.mxu0 0.0
          %1285 = vmatpush.xpose.msra.mxu0 0.0
          %1286 = vmatpush.xpose.msra.mxu0 0.0
          %1287 = vmatpush.xpose.msra.mxu0 0.0
          %1288 = vmatpush.xpose.msra.mxu0 0.0
          %1289 = vmatpush.xpose.msra.mxu0 0.0
          %1290 = vmatpush.xpose.msra.mxu0 0.0
          %1291 = vmatpush.xpose.msra.mxu0 0.0
          %1292 = vmatpush.xpose.msra.mxu0 0.0
          %1293 = vmatpush.xpose.msra.mxu0 0.0
          %1294 = vmatpush.xpose.msra.mxu0 %v1278
          %1295 = vmatpush.xpose.msra.mxu0 %v1275
          %1296 = vmatmul.f32.gmra.mxu0 %v1272
          %v1297 = vpop.f32.mrf.mxu0
          %v1298 = vadd.f32 0.0, %v1297
          %1299 = vdwg.mxu0
          %v1300 = vsel %vm1176, %v1298, -inf
          %1301 = vmax.xlane.f32.xlu0 %v1300
          %v1302 = vpop.xlane.xlu0 %1301
          %v1303 = vsub.f32 %v1298, %v1302
          %v1304 = vmul.f32 %v1303, 1.442695
          %v1305 = vpow.pop %v1304
          %v1306 = vsel %vm1176, %v1305, 0.0
          %1307 = vadd.xlane.f32.xlu0 %v1306
          %v1308 = vpop.xlane.xlu0 %1307
          %v1309 = vrcp.pop %v1308
          %v1310 = vmul.f32 %v1305, %v1309
          %1311 = vrot.lane.b32.xlu0 %v863, 96
          %v1312 = vpop.permute.xlu0 %1311
          %1313 = vrot.lane.b32.xlu0 %v866, 96
          %v1314 = vpop.permute.xlu0 %1313
          %v1318 = vsel %vm1176, %v1310, 0
          %1320 = vmatpush.msra.mxu0 0.0
          %1321 = vmatpush.msra.mxu0 0.0
          %1322 = vmatpush.msra.mxu0 0.0
          %1323 = vmatpush.msra.mxu0 0.0
          %1324 = vmatpush.msra.mxu0 0.0
          %1325 = vmatpush.msra.mxu0 0.0
          %1326 = vmatpush.msra.mxu0 0.0
          %1327 = vmatpush.msra.mxu0 0.0
          %1328 = vmatpush.msra.mxu0 0.0
          %1329 = vmatpush.msra.mxu0 0.0
          %1330 = vmatpush.msra.mxu0 0.0
          %1331 = vmatpush.msra.mxu0 0.0
          %1332 = vmatpush.msra.mxu0 0.0
          %1333 = vmatpush.msra.mxu0 0.0
          %1334 = vmatpush.msra.mxu0 %v1314
          %1335 = vmatpush.msra.mxu0 %v1312
          %1336 = vmatmul.f32.gmra.mxu0 %v1318
          %v1337 = vpop.f32.mrf.mxu0
          %v1338 = vadd.f32 0.0, %v1337
          %1339 = vdwg.mxu0
          %1340 = vrot.lane.b32.xlu0 %v1270, 120
          %v1341 = vpop.permute.xlu0 %1340
          %1342 = vrot.lane.b32.xlu0 %v863, 120
          %v1343 = vpop.permute.xlu0 %1342
          %1344 = vrot.lane.b32.xlu0 %v866, 120
          %v1345 = vpop.permute.xlu0 %1344
          %v1346 = vsel %vm905, %v1341, 0
          %v1348 = vsel %vm905, %v1343, 0
          %v1350 = vsel %vm905, %v1345, 0
          %1352 = vmatpush.xpose.msra.mxu0 0.0
          %1353 = vmatpush.xpose.msra.mxu0 0.0
          %1354 = vmatpush.xpose.msra.mxu0 0.0
          %1355 = vmatpush.xpose.msra.mxu0 0.0
          %1356 = vmatpush.xpose.msra.mxu0 0.0
          %1357 = vmatpush.xpose.msra.mxu0 0.0
          %1358 = vmatpush.xpose.msra.mxu0 0.0
          %1359 = vmatpush.xpose.msra.mxu0 0.0
          %1360 = vmatpush.xpose.msra.mxu0 0.0
          %1361 = vmatpush.xpose.msra.mxu0 0.0
          %1362 = vmatpush.xpose.msra.mxu0 0.0
          %1363 = vmatpush.xpose.msra.mxu0 0.0
          %1364 = vmatpush.xpose.msra.mxu0 0.0
          %1365 = vmatpush.xpose.msra.mxu0 0.0
          %1366 = vmatpush.xpose.msra.mxu0 %v1350
          %1367 = vmatpush.xpose.msra.mxu0 %v1348
          %1368 = vmatmul.f32.gmra.mxu0 %v1346
          %v1369 = vpop.f32.mrf.mxu0
          %v1370 = vadd.f32 0.0, %v1369
          %1371 = vdwg.mxu0
          %v1372 = vsel %vm1176, %v1370, -inf
          %1373 = vmax.xlane.f32.xlu0 %v1372
          %v1374 = vpop.xlane.xlu0 %1373
          %v1375 = vsub.f32 %v1370, %v1374
          %v1376 = vmul.f32 %v1375, 1.442695
          %v1377 = vpow.pop %v1376
          %v1378 = vsel %vm1176, %v1377, 0.0
          %1379 = vadd.xlane.f32.xlu0 %v1378
          %v1380 = vpop.xlane.xlu0 %1379
          %v1381 = vrcp.pop %v1380
          %v1382 = vmul.f32 %v1377, %v1381
          %1383 = vrot.lane.b32.xlu0 %v863, 88
          %v1384 = vpop.permute.xlu0 %1383
          %1385 = vrot.lane.b32.xlu0 %v866, 88
          %v1386 = vpop.permute.xlu0 %1385
          %v1390 = vsel %vm1176, %v1382, 0
          %1392 = vmatpush.msra.mxu0 0.0
          %1393 = vmatpush.msra.mxu0 0.0
          %1394 = vmatpush.msra.mxu0 0.0
          %1395 = vmatpush.msra.mxu0 0.0
          %1396 = vmatpush.msra.mxu0 0.0
          %1397 = vmatpush.msra.mxu0 0.0
          %1398 = vmatpush.msra.mxu0 0.0
          %1399 = vmatpush.msra.mxu0 0.0
          %1400 = vmatpush.msra.mxu0 0.0
          %1401 = vmatpush.msra.mxu0 0.0
          %1402 = vmatpush.msra.mxu0 0.0
          %1403 = vmatpush.msra.mxu0 0.0
          %1404 = vmatpush.msra.mxu0 0.0
          %1405 = vmatpush.msra.mxu0 0.0
          %1406 = vmatpush.msra.mxu0 %v1386
          %1407 = vmatpush.msra.mxu0 %v1384
          %1408 = vmatmul.f32.gmra.mxu0 %v1390
          %v1409 = vpop.f32.mrf.mxu0
          %v1410 = vadd.f32 0.0, %v1409
          %1411 = vdwg.mxu0
          %1412 = vrot.lane.b32.xlu0 %v1270, 112
          %v1413 = vpop.permute.xlu0 %1412
          %1414 = vrot.lane.b32.xlu0 %v863, 112
          %v1415 = vpop.permute.xlu0 %1414
          %1416 = vrot.lane.b32.xlu0 %v866, 112
          %v1417 = vpop.permute.xlu0 %1416
          %v1418 = vsel %vm905, %v1413, 0
          %v1420 = vsel %vm905, %v1415, 0
          %v1422 = vsel %vm905, %v1417, 0
          %1424 = vmatpush.xpose.msra.mxu0 0.0
          %1425 = vmatpush.xpose.msra.mxu0 0.0
          %1426 = vmatpush.xpose.msra.mxu0 0.0
          %1427 = vmatpush.xpose.msra.mxu0 0.0
          %1428 = vmatpush.xpose.msra.mxu0 0.0
          %1429 = vmatpush.xpose.msra.mxu0 0.0
          %1430 = vmatpush.xpose.msra.mxu0 0.0
          %1431 = vmatpush.xpose.msra.mxu0 0.0
          %1432 = vmatpush.xpose.msra.mxu0 0.0
          %1433 = vmatpush.xpose.msra.mxu0 0.0
          %1434 = vmatpush.xpose.msra.mxu0 0.0
          %1435 = vmatpush.xpose.msra.mxu0 0.0
          %1436 = vmatpush.xpose.msra.mxu0 0.0
          %1437 = vmatpush.xpose.msra.mxu0 0.0
          %1438 = vmatpush.xpose.msra.mxu0 %v1422
          %1439 = vmatpush.xpose.msra.mxu0 %v1420
          %1440 = vmatmul.f32.gmra.mxu0 %v1418
          %v1441 = vpop.f32.mrf.mxu0
          %v1442 = vadd.f32 0.0, %v1441
          %1443 = vdwg.mxu0
          %v1444 = vsel %vm1176, %v1442, -inf
          %1445 = vmax.xlane.f32.xlu0 %v1444
          %v1446 = vpop.xlane.xlu0 %1445
          %v1447 = vsub.f32 %v1442, %v1446
          %v1448 = vmul.f32 %v1447, 1.442695
          %v1449 = vpow.pop %v1448
          %v1450 = vsel %vm1176, %v1449, 0.0
          %1451 = vadd.xlane.f32.xlu0 %v1450
          %v1452 = vpop.xlane.xlu0 %1451
          %v1453 = vrcp.pop %v1452
          %v1454 = vmul.f32 %v1449, %v1453
          %1455 = vrot.lane.b32.xlu0 %v863, 80
          %v1456 = vpop.permute.xlu0 %1455
          %1457 = vrot.lane.b32.xlu0 %v866, 80
          %v1458 = vpop.permute.xlu0 %1457
          %v1462 = vsel %vm1176, %v1454, 0
          %1464 = vmatpush.msra.mxu0 0.0
          %1465 = vmatpush.msra.mxu0 0.0
          %1466 = vmatpush.msra.mxu0 0.0
          %1467 = vmatpush.msra.mxu0 0.0
          %1468 = vmatpush.msra.mxu0 0.0
          %1469 = vmatpush.msra.mxu0 0.0
          %1470 = vmatpush.msra.mxu0 0.0
          %1471 = vmatpush.msra.mxu0 0.0
          %1472 = vmatpush.msra.mxu0 0.0
          %1473 = vmatpush.msra.mxu0 0.0
          %1474 = vmatpush.msra.mxu0 0.0
          %1475 = vmatpush.msra.mxu0 0.0
          %1476 = vmatpush.msra.mxu0 0.0
          %1477 = vmatpush.msra.mxu0 0.0
          %1478 = vmatpush.msra.mxu0 %v1458
          %1479 = vmatpush.msra.mxu0 %v1456
          %1480 = vmatmul.f32.gmra.mxu0 %v1462
          %v1481 = vpop.f32.mrf.mxu0
          %v1482 = vadd.f32 0.0, %v1481
          %1483 = vdwg.mxu0
          %1484 = vrot.lane.b32.xlu0 %v1270, 104
          %v1485 = vpop.permute.xlu0 %1484
          %1486 = vrot.lane.b32.xlu0 %v863, 104
          %v1487 = vpop.permute.xlu0 %1486
          %1488 = vrot.lane.b32.xlu0 %v866, 104
          %v1489 = vpop.permute.xlu0 %1488
          %v1490 = vsel %vm905, %v1485, 0
          %v1492 = vsel %vm905, %v1487, 0
          %v1494 = vsel %vm905, %v1489, 0
          %1496 = vmatpush.xpose.msra.mxu0 0.0
          %1497 = vmatpush.xpose.msra.mxu0 0.0
          %1498 = vmatpush.xpose.msra.mxu0 0.0
          %1499 = vmatpush.xpose.msra.mxu0 0.0
          %1500 = vmatpush.xpose.msra.mxu0 0.0
          %1501 = vmatpush.xpose.msra.mxu0 0.0
          %1502 = vmatpush.xpose.msra.mxu0 0.0
          %1503 = vmatpush.xpose.msra.mxu0 0.0
          %1504 = vmatpush.xpose.msra.mxu0 0.0
          %1505 = vmatpush.xpose.msra.mxu0 0.0
          %1506 = vmatpush.xpose.msra.mxu0 0.0
          %1507 = vmatpush.xpose.msra.mxu0 0.0
          %1508 = vmatpush.xpose.msra.mxu0 0.0
          %1509 = vmatpush.xpose.msra.mxu0 0.0
          %1510 = vmatpush.xpose.msra.mxu0 %v1494
          %1511 = vmatpush.xpose.msra.mxu0 %v1492
          %1512 = vmatmul.f32.gmra.mxu0 %v1490
          %v1513 = vpop.f32.mrf.mxu0
          %v1514 = vadd.f32 0.0, %v1513
          %1515 = vdwg.mxu0
          %v1516 = vsel %vm1176, %v1514, -inf
          %1517 = vmax.xlane.f32.xlu0 %v1516
          %v1518 = vpop.xlane.xlu0 %1517
          %v1519 = vsub.f32 %v1514, %v1518
          %v1520 = vmul.f32 %v1519, 1.442695
          %v1521 = vpow.pop %v1520
          %v1522 = vsel %vm1176, %v1521, 0.0
          %1523 = vadd.xlane.f32.xlu0 %v1522
          %v1524 = vpop.xlane.xlu0 %1523
          %v1525 = vrcp.pop %v1524
          %v1526 = vmul.f32 %v1521, %v1525
          %1527 = vrot.lane.b32.xlu0 %v863, 72
          %v1528 = vpop.permute.xlu0 %1527
          %1529 = vrot.lane.b32.xlu0 %v866, 72
          %v1530 = vpop.permute.xlu0 %1529
          %v1534 = vsel %vm1176, %v1526, 0
          %1536 = vmatpush.msra.mxu0 0.0
          %1537 = vmatpush.msra.mxu0 0.0
          %1538 = vmatpush.msra.mxu0 0.0
          %1539 = vmatpush.msra.mxu0 0.0
          %1540 = vmatpush.msra.mxu0 0.0
          %1541 = vmatpush.msra.mxu0 0.0
          %1542 = vmatpush.msra.mxu0 0.0
          %1543 = vmatpush.msra.mxu0 0.0
          %1544 = vmatpush.msra.mxu0 0.0
          %1545 = vmatpush.msra.mxu0 0.0
          %1546 = vmatpush.msra.mxu0 0.0
          %1547 = vmatpush.msra.mxu0 0.0
          %1548 = vmatpush.msra.mxu0 0.0
          %1549 = vmatpush.msra.mxu0 0.0
          %1550 = vmatpush.msra.mxu0 %v1530
          %1551 = vmatpush.msra.mxu0 %v1528
          %1552 = vmatmul.f32.gmra.mxu0 %v1534
          %v1553 = vpop.f32.mrf.mxu0
          %v1554 = vadd.f32 0.0, %v1553
          %1555 = vdwg.mxu0
          %1557 = vrot.lane.b32.xlu0 %v1410, 8
          %v1558 = vpop.permute.xlu0 %1557
          %1561 = vrot.lane.b32.xlu0 %v1482, 16
          %v1562 = vpop.permute.xlu0 %1561
          %1565 = vrot.lane.b32.xlu0 %v1554, 24
          %v1566 = vpop.permute.xlu0 %1565
          %v1568 = vsel %vm905, %v1338, %v1558
          %v1569 = vsel %vm1176, %v1568, %v1562
          %v1570 = vsel %vm1178, %v1569, %v1566
          %v1572 = vperm.slane %v814, 0
          %v1575 = vsel %vm838, %v1570, 0
          %1577 = vmatpush.msra.mxu0 0.0
          %1578 = vmatpush.msra.mxu0 0.0
          %1579 = vmatpush.msra.mxu0 0.0
          %1580 = vmatpush.msra.mxu0 0.0
          %1581 = vmatpush.msra.mxu0 0.0
          %1582 = vmatpush.msra.mxu0 0.0
          %1583 = vmatpush.msra.mxu0 0.0
          %1584 = vmatpush.msra.mxu0 0.0
          %1585 = vmatpush.msra.mxu0 0.0
          %1586 = vmatpush.msra.mxu0 0.0
          %1587 = vmatpush.msra.mxu0 0.0
          %1588 = vmatpush.msra.mxu0 0.0
          %1589 = vmatpush.msra.mxu0 %v813
          %1590 = vmatpush.msra.mxu0 %v812
          %1591 = vmatpush.msra.mxu0 %v811
          %1592 = vmatpush.msra.mxu0 %v810
          %1593 = vmatmul.f32.gmra.mxu0 %v1575
          %v1594 = vpop.f32.mrf.mxu0
          %v1595 = vadd.f32 %v1572, %v1594
          %1596 = vdwg.mxu0
          %v1597 = vadd.f32 %v1243, %v1595
          %v1598 = vsel %vm838, %v1597, 0.0
          %1599 = vadd.xlane.f32.xlu0 %v1598
          %v1600 = vpop.xlane.xlu0 %1599
          %v1601 = vmul.f32 %v1600, %v1216
          %v1602 = vsub.f32 %v1597, %v1601
          %v1603 = vmul.f32 %v1602, %v1602
          %v1604 = vsel %vm838, %v1603, 0.0
          %1605 = vadd.xlane.f32.xlu0 %v1604
          %v1606 = vpop.xlane.xlu0 %1605
          %v1607 = vmul.f32 %v1606, %v1216
          %v1608 = vadd.f32 %v1607, 1e-05
          %v1609 = vrsqrt.pop %v1608
          %v1610 = vmul.f32 %v1609, %v1608
          %v1611 = vmul.f32 %v1610, %v1609
          %v1612 = vmul.f32 0.5, %v1611
          %v1613 = vsub.f32 1.5, %v1612
          %v1614 = vmul.f32 %v1609, %v1613
          %vm1615 = vweird.f32 %v1608
          %vm1616 = vweird.f32 %v1609
          %vm1617 = vmor %vm1615, %vm1616
          %v1618 = vsel %vm1617, %v1609, %v1614
          %v1619 = vmul.f32 %v1602, %v1618
          %v1621 = vperm.slane %v831, 0
          %v1623 = vmul.f32 %v1619, %v1621
          %v1625 = vperm.slane %v832, 0
          %v1627 = vadd.f32 %v1623, %v1625
          %v1629 = vperm.slane %v819, 0
          %v1632 = vsel %vm838, %v1627, 0
          %1634 = vmatpush.msra.mxu0 0.0
          %1635 = vmatpush.msra.mxu0 0.0
          %1636 = vmatpush.msra.mxu0 0.0
          %1637 = vmatpush.msra.mxu0 0.0
          %1638 = vmatpush.msra.mxu0 0.0
          %1639 = vmatpush.msra.mxu0 0.0
          %1640 = vmatpush.msra.mxu0 0.0
          %1641 = vmatpush.msra.mxu0 0.0
          %1642 = vmatpush.msra.mxu0 0.0
          %1643 = vmatpush.msra.mxu0 0.0
          %1644 = vmatpush.msra.mxu0 0.0
          %1645 = vmatpush.msra.mxu0 0.0
          %1646 = vmatpush.msra.mxu0 %v818
          %1647 = vmatpush.msra.mxu0 %v817
          %1648 = vmatpush.msra.mxu0 %v816
          %1649 = vmatpush.msra.mxu0 %v815
          %1650 = vmatmul.f32.gmra.mxu0 %v1632
          %v1651 = vpop.f32.mrf.mxu0
          %v1652 = vadd.f32 %v1629, %v1651
          %1653 = vdwg.mxu0
          %v1654 = vmax.f32 %v1652, 0.0
          %v1656 = vperm.slane %v828, 0
          %vm1658 = vcmask 523264
          %v1660 = vsel %vm1658, %v1654, 0
          %1662 = vmatpush.msra.mxu0 0.0
          %1663 = vmatpush.msra.mxu0 0.0
          %1664 = vmatpush.msra.mxu0 0.0
          %1665 = vmatpush.msra.mxu0 0.0
          %1666 = vmatpush.msra.mxu0 0.0
          %1667 = vmatpush.msra.mxu0 0.0
          %1668 = vmatpush.msra.mxu0 0.0
          %1669 = vmatpush.msra.mxu0 0.0
          %1670 = vmatpush.msra.mxu0 %v827
          %1671 = vmatpush.msra.mxu0 %v826
          %1672 = vmatpush.msra.mxu0 %v825
          %1673 = vmatpush.msra.mxu0 %v824
          %1674 = vmatpush.msra.mxu0 %v823
          %1675 = vmatpush.msra.mxu0 %v822
          %1676 = vmatpush.msra.mxu0 %v821
          %1677 = vmatpush.msra.mxu0 %v820
          %1678 = vmatmul.f32.gmra.mxu0 %v1660
          %v1679 = vpop.f32.mrf.mxu0
          %v1680 = vadd.f32 %v1656, %v1679
          %1681 = vdwg.mxu0
          %v1682 = vadd.f32 %v1627, %v1680
          %v1683 = vsel %vm838, %v1682, 0.0
          %1684 = vadd.xlane.f32.xlu0 %v1683
          %v1685 = vpop.xlane.xlu0 %1684
          %v1686 = vmul.f32 %v1685, %v1216
          %v1687 = vsub.f32 %v1682, %v1686
          %v1688 = vmul.f32 %v1687, %v1687
          %v1689 = vsel %vm838, %v1688, 0.0
          %1690 = vadd.xlane.f32.xlu0 %v1689
          %v1691 = vpop.xlane.xlu0 %1690
          %v1692 = vmul.f32 %v1691, %v1216
          %v1693 = vadd.f32 %v1692, 1e-05
          %v1694 = vrsqrt.pop %v1693
          %v1695 = vmul.f32 %v1694, %v1693
          %v1696 = vmul.f32 %v1695, %v1694
          %v1697 = vmul.f32 0.5, %v1696
          %v1698 = vsub.f32 1.5, %v1697
          %v1699 = vmul.f32 %v1694, %v1698
          %vm1700 = vweird.f32 %v1693
          %vm1701 = vweird.f32 %v1694
          %vm1702 = vmor %vm1700, %vm1701
          %v1703 = vsel %vm1702, %v1694, %v1699
          %v1704 = vmul.f32 %v1687, %v1703
          %v1706 = vperm.slane %v833, 0
          %v1708 = vmul.f32 %v1704, %v1706
          %v1710 = vperm.slane %v834, 0
          %v1712 = vadd.f32 %v1708, %v1710
        $region133: #{tpu_custom_call.1} parent=107 // loop_footer
          %s873 = sadd.s32 1, %s869
        $region134: #{tpu_custom_call.1} parent=107 // loop_footer_branch
          %868 = sbr.rel target = $region130
        $region135: #{tpu_custom_call.1} parent=107 // loop_exit
          _
        %1713 = vst.msk [vmem:[%s781] sm:$0xff] %vm838, %v874
        %s1714 = sand.u32 %s521, 1
        %s1715 = scalar_lea.sflag [#allocation4], %s1714
        %s1716 = sand.u32 %s521, 1
        %s1717 = smul.addr %s1716, 8
        %s1718 = scalar_lea.vmem [#allocation11], %s1717
        // Predicated region
        $region136: #{tpu_custom_call.1} parent=107 // pred_check
          %p1719 = pneg %p531
        $region137: #{tpu_custom_call.1} parent=107 // pred_check_branch
          %1721 = sbr.rel (%p1719) target = $region139
        $region138: #{tpu_custom_call.1} parent=107 // pred_region
          %1723 = vsyncadd %s1715, 0
          %s1724 = smul.addr %s41, 8
          %s1725 = scalar_lea.hbm %s22, %s1724
          %s1727 = sshll.u32 %s1718, 4
          %s1728 = int_to_ptr.vmem [resolvable:$true] %s1727
          %s1729 = sshll.u32 %s1725, 4
          %s1730 = int_to_ptr.hbm [resolvable:$true] %s1729
          %1732 = dma.vmem_to_hbm [thread:$0]  %s1728, 128, %s1730, %s1715
        $region139: #{tpu_custom_call.1} parent=107 // pred_fallthru
          _
      $region108: #{tpu_custom_call.1} parent=5 // pred_fallthru
        _
      %p1733 = scmp.le.s32.totalorder 2, %s36
      // Predicated region
      $region140: #{tpu_custom_call.1} parent=5 // pred_check
        %p1734 = pneg %p1733
      $region141: #{tpu_custom_call.1} parent=5 // pred_check_branch
        %1736 = sbr.rel (%p1734) target = $region143
      $region142: #{tpu_custom_call.1} parent=5 // pred_region
        %s1737 = ssub.s32 %s36, 2
        // Predicated region
        $region144: #{tpu_custom_call.1} parent=142 // pred_check
          %p1738 = pneg %p537
        $region145: #{tpu_custom_call.1} parent=142 // pred_check_branch
          %1740 = sbr.rel (%p1738) target = $region147
        $region146: #{tpu_custom_call.1} parent=142 // pred_region
          %s1741 = sand.u32 %s522, 1
          %s1742 = scalar_lea.sflag [#allocation4], %s1741
          %s1743 = sand.u32 %s522, 1
          %s1744 = smul.addr %s1743, 8
          %s1745 = scalar_lea.vmem [#allocation11], %s1744
          %1747 = dma.done %s1742, 128
        $region147: #{tpu_custom_call.1} parent=142 // pred_fallthru
          _
      $region143: #{tpu_custom_call.1} parent=5 // pred_fallthru
        _
    $region6: #{tpu_custom_call.1} parent=1 // loop_footer
      %s40 = sadd.s32 1, %s36
    $region7: #{tpu_custom_call.1} parent=1 // loop_footer_branch
      %35 = sbr.rel target = $region3
    $region8: #{tpu_custom_call.1} parent=1 // loop_exit
      _
    %1748 = vsyncpa [#allocation3], 1
    %s1749 = scalar_lea.sflag [#allocation3], 1
    %1750 = vsyncpa %s1749, 1
    %1751 = vsyncpa [#allocation6], 1
    %1752 = vsyncpa [#allocation9], 1
    %1753 = vsyncpa [#allocation4], 1
    %s1754 = scalar_lea.sflag [#allocation4], 1
    %1755 = vsyncpa %s1754, 1

</llo_original>
